<compile_context>
chip_gen: v5e
topology: v5e:2x2
jax: 0.10.0
libtpu: 0.0.40
codegen_flags: <defaults>
</compile_context>

<pallas_src>
import jax
import jax.numpy as jnp
import numpy as np
from jax.experimental import pallas as pl
from jax.experimental.pallas import tpu as pltpu

BN_EPS = 1e-5           # PyTorch BatchNorm default eps
SOFTPLUS_EPS = 1e-6     # Encoder2D.epsilon

TM_MAX = 512            # max row-tile (rows of the im2col matrix)
TK_MAX = 2048           # K is tiled (reduction grid axis) only beyond this


def _round_up(x, m):
    return ((x + m - 1) // m) * m


def _pick_tm(M):
    """Row tile: aim for >= 2 M-blocks (megacore), cap at TM_MAX, multiple of 8."""
    if M <= 16:
        return M                       # block == full dim (always legal)
    tm = _round_up((M + 1) // 2, 8)
    return min(tm, TM_MAX)


# --------------------------------------------------------------------------- #
# Fused GEMM (+ folded-BN bias) + activation (+ residual) Pallas kernel
# --------------------------------------------------------------------------- #
def _make_fused_kernel(act: str, has_res: bool, split=None):
    """act((x @ w) + b) [+ residual]; K accumulated over grid axis 1."""

    def kernel(x_ref, w_ref, b_ref, *rest):
        if has_res:
            r_ref, o_ref, acc_ref = rest
        else:
            (o_ref, acc_ref) = rest
            r_ref = None

        k_idx = pl.program_id(1)

        @pl.when(k_idx == 0)
        def _():
            acc_ref[...] = jnp.zeros_like(acc_ref)

        # bf16 MXU matmul, f32 accumulation.
        acc_ref[...] += jnp.dot(x_ref[...], w_ref[...],
                                preferred_element_type=jnp.float32)

        @pl.when(k_idx == pl.num_programs(1) - 1)
        def _():
            z = acc_ref[...] + b_ref[...]          # folded conv-bias + BN shift (f32)
            if act == "relu":
                z = jnp.maximum(z, 0.0)
            elif act == "leaky":
                z = jnp.where(z > 0.0, z, 0.2 * z)
            elif act == "split_softplus":
                # columns [0, split) pass through (mu head);
                # columns [split, N) get softplus + eps (logvar head).
                sp = (jnp.maximum(z, 0.0)
                      + jnp.log1p(jnp.exp(-jnp.abs(z)))
                      + SOFTPLUS_EPS)
                col = jax.lax.broadcasted_iota(jnp.int32, z.shape, 1)
                z = jnp.where(col < split, z, sp)
            # act == "none": passthrough
            if has_res:
                z = z + r_ref[...].astype(jnp.float32)   # residual AFTER activation
            o_ref[...] = z.astype(o_ref.dtype)

    return kernel


def fused_gemm(x, w, b, act="none", residual=None,
               out_dtype=jnp.float32, split=None):
    """act(x @ w + b) [+ residual] in a single Pallas kernel.

    x: (M, K), w: (K, N), b: (N,), residual: (M, N) or None.
    MXU operands are cast to bf16; accumulation / epilogue in f32.
    """
    M, K = x.shape
    Kw, N = w.shape
    assert K == Kw

    # --- K tiling (only needed for very large K, e.g. the FC head at big img_dim)
    if K > TK_MAX:
        tk = TK_MAX
        Kp = _round_up(K, tk)
        if Kp != K:                               # cheap: only on the (small-M) FC path
            x = jnp.pad(x, ((0, 0), (0, Kp - K)))
            w = jnp.pad(w, ((0, Kp - K), (0, 0)))
        K = Kp
    else:
        tk = K
    grid_k = K // tk

    # --- M tiling (no full-array pad; tail block handled by masked stores)
    tm = _pick_tm(M)
    grid_m = pl.cdiv(M, tm)

    xb = x.astype(jnp.bfloat16)
    wb = w.astype(jnp.bfloat16)
    b2 = b.reshape(1, N).astype(jnp.float32)

    in_specs = [
        pl.BlockSpec((tm, tk), lambda i, k: (i, k)),   # im2col row-tile / K-slab
        pl.BlockSpec((tk, N), lambda i, k: (k, 0)),    # weight K-slab
        pl.BlockSpec((1, N), lambda i, k: (0, 0)),     # folded bias (f32)
    ]
    args = [xb, wb, b2]

    has_res = residual is not None
    if has_res:
        in_specs.append(pl.BlockSpec((tm, N), lambda i, k: (i, 0)))
        args.append(residual)

    out = pl.pallas_call(
        _make_fused_kernel(act, has_res, split),
        out_shape=jax.ShapeDtypeStruct((M, N), out_dtype),
        grid=(grid_m, grid_k),
        in_specs=in_specs,
        out_specs=pl.BlockSpec((tm, N), lambda i, k: (i, 0)),
        scratch_shapes=[pltpu.VMEM((tm, N), jnp.float32)],
        compiler_params=pltpu.CompilerParams(
            dimension_semantics=("parallel", "arbitrary"),
            vmem_limit_bytes=32 * 1024 * 1024),
    )(*args)
    return out


# --------------------------------------------------------------------------- #
# Conv-as-GEMM glue (im2col, in bf16) and layer helpers
# --------------------------------------------------------------------------- #
def im2col(x_nhwc, k, stride, pad):
    """Extract k x k patches. Returns (N*Ho*Wo, k*k*C) (same dtype as x)."""
    Nb, H, W, C = x_nhwc.shape
    xp = jnp.pad(x_nhwc, ((0, 0), (pad, pad), (pad, pad), (0, 0)))
    Ho = (H + 2 * pad - k) // stride + 1
    Wo = (W + 2 * pad - k) // stride + 1
    cols = []
    for i in range(k):
        for j in range(k):
            cols.append(
                xp[:, i:i + stride * (Ho - 1) + 1:stride,
                      j:j + stride * (Wo - 1) + 1:stride, :])
    patches = jnp.concatenate(cols, axis=-1)  # (N, Ho, Wo, k*k*C)
    return patches.reshape(Nb * Ho * Wo, k * k * C), (Nb, Ho, Wo)


def fold_bn(bn):
    scale = bn["gamma"] / jnp.sqrt(bn["var"] + BN_EPS)
    shift = bn["beta"] - bn["mean"] * scale
    return scale, shift


def fold_into_weights(conv_p, bn_p):
    """Fold conv bias + eval-mode BN into the GEMM weight/bias (host-side, tiny)."""
    scale, shift = fold_bn(bn_p)
    w_f = conv_p["w"] * scale[None, :]
    b_f = conv_p["b"] * scale + shift
    return w_f, b_f


def conv_bn_act(x_nhwc, conv_p, bn_p, k, stride, pad, act,
                residual=None, out_dtype=jnp.bfloat16):
    patches, (Nb, Ho, Wo) = im2col(x_nhwc, k, stride, pad)
    cout = conv_p["w"].shape[1]
    w_f, b_f = fold_into_weights(conv_p, bn_p)
    r2d = residual.reshape(Nb * Ho * Wo, cout) if residual is not None else None
    y = fused_gemm(patches, w_f, b_f, act=act, residual=r2d, out_dtype=out_dtype)
    return y.reshape(Nb, Ho, Wo, cout)


def resblock_forward(x_nhwc, p):
    """ResBlock2D forward (NHWC, bf16 activations)."""
    cin = x_nhwc.shape[-1]
    cout = p["conv2"]["w"].shape[1]
    # main branch conv1: 3x3 same, cin -> cin, leaky(0.2)
    res = conv_bn_act(x_nhwc, p["conv1"], p["bn1"], 3, 1, 1, "leaky")
    # shortcut branch
    if p["downsample"]:
        shortcut = x_nhwc[:, ::2, ::2, :]          # F.interpolate(scale=0.5, nearest)
    else:
        shortcut = x_nhwc
    if cin < cout:                                  # torch.cat((x, zeros_like(x)), 1)
        shortcut = jnp.concatenate([shortcut, jnp.zeros_like(shortcut)], axis=-1)
    # TODO(synk): cin > cout (1x1-conv shortcut) branch is never reached by Encoder2D.
    # main branch conv2 + bn2 + leaky, residual added AFTER activation (matches PyTorch)
    if p["downsample"]:
        out = conv_bn_act(res, p["conv2"], p["bn2"], 2, 2, 0, "leaky", residual=shortcut)
    else:
        out = conv_bn_act(res, p["conv2"], p["bn2"], 3, 1, 1, "leaky", residual=shortcut)
    return out


# --------------------------------------------------------------------------- #
# Parameter construction (deterministic, synthetic)
# --------------------------------------------------------------------------- #
def init_conv(key, k, cin, cout):
    kw, kb = jax.random.split(key)
    fan_in = k * k * cin
    w = jax.random.normal(kw, (k * k * cin, cout), jnp.float32) / np.sqrt(fan_in)
    b = 0.01 * jax.random.normal(kb, (cout,), jnp.float32)
    return {"w": w, "b": b}


def init_bn(c):
    return {"gamma": jnp.ones((c,), jnp.float32),
            "beta": jnp.zeros((c,), jnp.float32),
            "mean": jnp.zeros((c,), jnp.float32),
            "var": jnp.ones((c,), jnp.float32)}


def make_encoder_params(key, img_dim, code_dim, num_filters, num_input_channels=1):
    num_downsample = 4
    max_num_filters = 128
    keys = iter(jax.random.split(key, 64))

    params = {
        "conv1": init_conv(next(keys), 3, num_input_channels, num_filters),
        "bn1": init_bn(num_filters),
        "resnet": [],
    }

    def make_resblock(cin, cout, downsample):
        return {
            "downsample": downsample,
            "conv1": init_conv(next(keys), 3, cin, cin),
            "bn1": init_bn(cin),
            "conv2": init_conv(next(keys), 2 if downsample else 3, cin, cout),
            "bn2": init_bn(cout),
        }

    nf_in = num_filters
    nf_out = num_filters
    for _ in range(num_downsample):
        if nf_out < max_num_filters:
            nf_out *= 2
        params["resnet"].append(make_resblock(nf_in, nf_out, True))
        nf_in = nf_out
        params["resnet"].append(make_resblock(nf_in, nf_out, False))
        params["resnet"].append(make_resblock(nf_in, nf_out, False))

    downsampled = img_dim // 2 ** num_downsample
    final_conv_size = downsampled ** 2 * nf_out
    params["fc_mu"] = init_conv(next(keys), 1, final_conv_size, code_dim)
    params["fc_logvar"] = init_conv(next(keys), 1, final_conv_size, code_dim)
    params["bn_mu"] = init_bn(code_dim)
    params["bn_logvar"] = init_bn(code_dim)
    params["meta"] = dict(img_dim=img_dim, code_dim=code_dim,
                          num_input_channels=num_input_channels,
                          final_conv_size=final_conv_size)
    return params


# --------------------------------------------------------------------------- #
# Encoder2D forward
# --------------------------------------------------------------------------- #
def encoder2d_forward(x_nchw, params):
    meta = params["meta"]
    C, H = meta["num_input_channels"], meta["img_dim"]
    code_dim = meta["code_dim"]

    # x.reshape(-1, C, img_dim, img_dim) (PyTorch), then NCHW -> NHWC, bf16 activations
    x = x_nchw.reshape(-1, C, H, H).astype(jnp.float32)
    x = jnp.transpose(x, (0, 2, 3, 1)).astype(jnp.bfloat16)

    # conv1 + bn1 + relu
    x = conv_bn_act(x, params["conv1"], params["bn1"], 3, 1, 1, "relu")

    # residual tower
    for blk in params["resnet"]:
        x = resblock_forward(x, blk)

    # flatten in PyTorch NCHW order
    Nb = x.shape[0]
    flat = jnp.transpose(x, (0, 3, 1, 2)).reshape(Nb, -1)

    # fused fc_mu / fc_logvar head: concatenate along N, fold BN into the weights,
    # apply softplus+eps only to the logvar half inside the kernel epilogue.
    w_mu, b_mu = fold_into_weights(params["fc_mu"], params["bn_mu"])
    w_lv, b_lv = fold_into_weights(params["fc_logvar"], params["bn_logvar"])
    w_cat = jnp.concatenate([w_mu, w_lv], axis=1)
    b_cat = jnp.concatenate([b_mu, b_lv], axis=0)

    out = fused_gemm(flat, w_cat, b_cat, act="split_softplus",
                     out_dtype=jnp.float32, split=code_dim)
    mu = out[:, :code_dim]
    logvar = out[:, code_dim:]
    return mu, logvar


# --------------------------------------------------------------------------- #
# Self-check of the K-tiled / masked-tail GEMM path against a plain-JAX reference
# --------------------------------------------------------------------------- #
def _gemm_self_check():
    key = jax.random.PRNGKey(7)
    k1, k2, k3, k4 = jax.random.split(key, 4)
    M, K, N = 200, 4096, 128           # grid_k = 2 (K tiled), grid_m = 2 with a tail
    x = jax.random.normal(k1, (M, K), jnp.float32)
    w = jax.random.normal(k2, (K, N), jnp.float32) / np.sqrt(K)
    b = 0.1 * jax.random.normal(k3, (N,), jnp.float32)
    r = jax.random.normal(k4, (M, N), jnp.float32)

    got = fused_gemm(x, w, b, act="leaky", residual=r, out_dtype=jnp.float32)

    xb = x.astype(jnp.bfloat16).astype(jnp.float32)
    wb = w.astype(jnp.bfloat16).astype(jnp.float32)
    z = xb @ wb + b
    ref = jnp.where(z > 0.0, z, 0.2 * z) + r

    err = float(jnp.max(jnp.abs(got - ref)))
    assert err < 5e-2, f"fused_gemm self-check failed, max abs err = {err}"


# --------------------------------------------------------------------------- #
if __name__ == "__main__":
    # Small, downsample-compatible shapes: img_dim=16 (-> 1x1 after 4 downsamples),
    # num_filters=4 (-> 8,16,32,64), code_dim=16, batch=2, 1 input channel.
    IMG_DIM, CODE_DIM, NUM_FILTERS, NUM_IN_CH, BATCH = 16, 16, 4, 1, 2

    _gemm_self_check()

    key = jax.random.PRNGKey(0)
    k_param, k_data = jax.random.split(key)
    params = make_encoder_params(k_param, IMG_DIM, CODE_DIM, NUM_FILTERS, NUM_IN_CH)

    x = jax.random.normal(k_data, (BATCH, NUM_IN_CH, IMG_DIM, IMG_DIM), jnp.float32)

    mu, logvar = encoder2d_forward(x, params)
    mu = jax.block_until_ready(mu)
    logvar = jax.block_until_ready(logvar)

    assert mu.shape == (BATCH, CODE_DIM) and logvar.shape == (BATCH, CODE_DIM)
    assert bool(jnp.all(jnp.isfinite(mu))) and bool(jnp.all(logvar > 0))
    print("KERNEL_OK")
</pallas_src>

<mosaic_0001>
module attributes {stable_mosaic.version = 11 : i64} {
  func.func @kernel(%arg0: i32, %arg1: i32, %arg2: memref<104x2048xbf16, #tpu.memory_space<vmem>>, %arg3: memref<2048x128xbf16, #tpu.memory_space<vmem>>, %arg4: memref<1x128xf32, #tpu.memory_space<vmem>>, %arg5: memref<104x128xf32, #tpu.memory_space<vmem>>, %arg6: memref<104x128xf32, #tpu.memory_space<vmem>>, %arg7: memref<104x128xf32, #tpu.memory_space<vmem>>) attributes {dimension_semantics = [#tpu.dimension_semantics<parallel>, #tpu.dimension_semantics<arbitrary>], iteration_bounds = array<i64: 2, 2>, scalar_prefetch = 0 : i64, scratch_operands = 1 : i64, tpu.core_type = #tpu.core_type<tc>, window_params = [{transform_indices = @transform_0, window_bounds = array<i64: 104, 2048>}, {transform_indices = @transform_1, window_bounds = array<i64: 2048, 128>}, {pipeline_mode = #tpu.pipeline_mode<synchronous>, transform_indices = @transform_2, window_bounds = array<i64: 1, 128>}, {transform_indices = @transform_3, window_bounds = array<i64: 104, 128>}, {transform_indices = @transform_4, window_bounds = array<i64: 104, 128>}]} {
    %c0_i32 = arith.constant 0 : i32
    %0 = arith.cmpi eq, %arg1, %c0_i32 : i32
    %1 = arith.extui %0 : i1 to i32
    %c0_i32_0 = arith.constant 0 : i32
    %2 = arith.cmpi ne, %1, %c0_i32_0 : i32
    scf.if %2 {
      %cst_9 = arith.constant 0.000000e+00 : f32
      %12 = vector.broadcast %cst_9 : f32 to vector<104x128xf32>
      %c0_10 = arith.constant 0 : index
      %c0_11 = arith.constant 0 : index
      %13 = vector.load %arg7[%c0_10, %c0_11] : memref<104x128xf32, #tpu.memory_space<vmem>>, vector<104x128xf32>
      tpu.vector_store %arg7[%c0_10, %c0_11], %12 {strides = array<i32>} : memref<104x128xf32, #tpu.memory_space<vmem>>, vector<104x128xf32>,
    } else {
    }
    %c0 = arith.constant 0 : index
    %c0_1 = arith.constant 0 : index
    %3 = vector.load %arg7[%c0, %c0_1] : memref<104x128xf32, #tpu.memory_space<vmem>>, vector<104x128xf32>
    %c0_2 = arith.constant 0 : index
    %c0_3 = arith.constant 0 : index
    %4 = vector.load %arg2[%c0_2, %c0_3] : memref<104x2048xbf16, #tpu.memory_space<vmem>>, vector<104x2048xbf16>
    %c0_4 = arith.constant 0 : index
    %c0_5 = arith.constant 0 : index
    %5 = vector.load %arg3[%c0_4, %c0_5] : memref<2048x128xbf16, #tpu.memory_space<vmem>>, vector<2048x128xbf16>
    %cst = arith.constant dense<0.000000e+00> : vector<104x128xf32>
    %6 = tpu.matmul %4, %5, %cst {dimension_numbers = #tpu.dot_dimension_numbers<[1], [0], [0], [1], [0, 0, 1, 1], [], []>} : vector<104x2048xbf16>, vector<2048x128xbf16>, vector<104x128xf32> -> vector<104x128xf32>
    %7 = arith.addf %3, %6 : vector<104x128xf32>
    %c0_6 = arith.constant 0 : index
    %c0_7 = arith.constant 0 : index
    %8 = vector.load %arg7[%c0_6, %c0_7] : memref<104x128xf32, #tpu.memory_space<vmem>>, vector<104x128xf32>
    tpu.vector_store %arg7[%c0_6, %c0_7], %7 {strides = array<i32>} : memref<104x128xf32, #tpu.memory_space<vmem>>, vector<104x128xf32>,
    %c1_i32 = arith.constant 1 : i32
    %9 = arith.cmpi eq, %arg1, %c1_i32 : i32
    %10 = arith.extui %9 : i1 to i32
    %c0_i32_8 = arith.constant 0 : i32
    %11 = arith.cmpi ne, %10, %c0_i32_8 : i32
    scf.if %11 {
      %c0_9 = arith.constant 0 : index
      %c0_10 = arith.constant 0 : index
      %12 = vector.load %arg7[%c0_9, %c0_10] : memref<104x128xf32, #tpu.memory_space<vmem>>, vector<104x128xf32>
      %c0_11 = arith.constant 0 : index
      %c0_12 = arith.constant 0 : index
      %13 = vector.load %arg4[%c0_11, %c0_12] : memref<1x128xf32, #tpu.memory_space<vmem>>, vector<1x128xf32>
      %14 = vector.broadcast %13 : vector<1x128xf32> to vector<104x128xf32>
      %15 = arith.addf %12, %14 : vector<104x128xf32>
      %cst_13 = arith.constant 0.000000e+00 : f32
      %16 = vector.broadcast %cst_13 : f32 to vector<104x128xf32>
      %17 = arith.cmpf ogt, %15, %16 : vector<104x128xf32>
      %cst_14 = arith.constant 2.000000e-01 : f32
      %18 = vector.broadcast %cst_14 : f32 to vector<104x128xf32>
      %19 = arith.mulf %18, %15 : vector<104x128xf32>
      %20 = arith.select %17, %15, %19 : vector<104x128xi1>, vector<104x128xf32>
      %c0_15 = arith.constant 0 : index
      %c0_16 = arith.constant 0 : index
      %21 = vector.load %arg5[%c0_15, %c0_16] : memref<104x128xf32, #tpu.memory_space<vmem>>, vector<104x128xf32>
      %22 = arith.addf %20, %21 : vector<104x128xf32>
      %c0_17 = arith.constant 0 : index
      %c0_18 = arith.constant 0 : index
      %23 = vector.load %arg6[%c0_17, %c0_18] : memref<104x128xf32, #tpu.memory_space<vmem>>, vector<104x128xf32>
      tpu.vector_store %arg6[%c0_17, %c0_18], %22 {strides = array<i32>} : memref<104x128xf32, #tpu.memory_space<vmem>>, vector<104x128xf32>,
    } else {
    }
    return
  }
  func.func @transform_0(%arg0: i32, %arg1: i32) -> (i32, i32) {
    %c0_i32 = arith.constant 0 : i32
    return %arg0, %arg1 : i32, i32
  }
  func.func @transform_1(%arg0: i32, %arg1: i32) -> (i32, i32) {
    %c0_i32 = arith.constant 0 : i32
    %c0_i32_0 = arith.constant 0 : i32
    return %arg1, %c0_i32 : i32, i32
  }
  func.func @transform_2(%arg0: i32, %arg1: i32) -> (i32, i32) {
    %c0_i32 = arith.constant 0 : i32
    %c0_i32_0 = arith.constant 0 : i32
    %c0_i32_1 = arith.constant 0 : i32
    return %c0_i32, %c0_i32_0 : i32, i32
  }
  func.func @transform_3(%arg0: i32, %arg1: i32) -> (i32, i32) {
    %c0_i32 = arith.constant 0 : i32
    %c0_i32_0 = arith.constant 0 : i32
    return %arg0, %c0_i32 : i32, i32
  }
  func.func @transform_4(%arg0: i32, %arg1: i32) -> (i32, i32) {
    %c0_i32 = arith.constant 0 : i32
    %c0_i32_0 = arith.constant 0 : i32
    return %arg0, %c0_i32 : i32, i32
  }
}

</mosaic_0001>

<llo_original>
// kernel: tpu_custom_call.1
$region0: #{tpu_custom_call.1}
  #allocation0 [shape = 'u32[]', space=smem, size = 0x4, offset = 0x4, fixed_abs, tag = 'smem constant byte address 0x4 - core index']
  #allocation1 [shape = 'u32[72,128]{1,0:T(1,128)}', space=vmem, size = 0x9000, scoped, tag = 'internal scratch']
  #allocation2 [shape = 'f32[104,128]{1,0:T(8,128)}', space=vmem, size = 0xd000, scoped, tag = 'scratch operand']
  %s0 = inlined_call_operand.hbm [shape: bf16[200,4096], index: 0, kind: input, shape index: {}]
  %s1 = inlined_call_operand.hbm [shape: bf16[4096,128], index: 1, kind: input, shape index: {}]
  %s2 = inlined_call_operand.hbm [shape: f32[1,128], index: 2, kind: input, shape index: {}]
  %s3 = inlined_call_operand.hbm [shape: f32[200,128], index: 3, kind: input, shape index: {}]
  %s4 = inlined_call_operand.hbm [shape: f32[200,128], index: 4, kind: output, shape index: {}]
  %s5 = sld [smem:[#allocation0]]
  $region73: #{tpu_custom_call.1} parent=0
    _
  %s7 = ssub.s32 1, %s5
  %s8 = scalar_select 0, %s7, %s5
  $region1: #{tpu_custom_call.1} parent=0
    #allocation3 [shape = 'u8[851968]{0}', space=vmem, size = 0xd0000, scoped, tag = 'input window, operand 0']
    #allocation4 [shape = 's32[2]{0}', space=sflag, size = 0x8, scoped, tag = 'scoped memory for tpu_custom_call.1']
    #allocation5 [shape = 's32[2]{0}', space=sflag, size = 0x8, scoped, tag = 'scoped memory for tpu_custom_call.1']
    #allocation6 [shape = 'u8[1048576]{0}', space=vmem, size = 0x100000, scoped, tag = 'input window, operand 1']
    #allocation7 [shape = 's32[2]{0}', space=sflag, size = 0x8, scoped, tag = 'scoped memory for tpu_custom_call.1']
    #allocation8 [shape = 'u8[512]{0}', space=vmem, size = 0x400, scoped, tag = 'input window, operand 2, single buffered']
    #allocation9 [shape = 'u8[106496]{0}', space=vmem, size = 0x1a000, scoped, tag = 'input window, operand 3']
    #allocation10 [shape = 's32[2]{0}', space=sflag, size = 0x8, scoped, tag = 'scoped memory for tpu_custom_call.1']
    #allocation11 [shape = 'u8[106496]{0}', space=vmem, size = 0x1a000, scoped, tag = 'output window, operand 0']
    %9 = vsyncpa [#allocation4], 0
    %s10 = scalar_lea.sflag [#allocation4], 1
    %11 = vsyncpa %s10, 0
    %12 = vsyncpa [#allocation7], 0
    %s13 = scalar_lea.sflag [#allocation7], 1
    %14 = vsyncpa %s13, 0
    %15 = vsyncpa [#allocation10], 0
    %s16 = scalar_lea.sflag [#allocation10], 1
    %17 = vsyncpa %s16, 0
    %18 = vsyncpa [#allocation5], 0
    %s19 = scalar_lea.sflag [#allocation5], 1
    %20 = vsyncpa %s19, 0
    loop: start=0, step=1, limit=6
    $region2: #{tpu_custom_call.1} parent=1 // loop_pre_header
      _
    $region3: #{tpu_custom_call.1} parent=1 // loop_header
      %s22 = sphi 0, %s26
      %p23 = scmp.ge.s32.totalorder %s22, 6
      %s29 = sphi 0, %s41
      %s30 = sphi 0, %s37
      %s31 = sphi 0, %s29
      %s32 = sphi 0, %s30
      %s33 = sphi 0, %s31
      %s34 = sphi 0, %s32
      %s46 = sphi 0, %s48
      %s49 = sphi 0, %s46
      %s50 = sphi 0, %s49
      %s66 = sphi 0, %s50
      %s72 = sphi 0, %s74
      %s75 = sphi 0, %s72
      %s76 = sphi 0, %s75
      %s92 = sphi 0, %s76
      %s96 = sphi 0, %s96
      %s98 = sphi 0, %s96
      %s99 = sphi 0, %s98
      %s113 = sphi 0, %s99
      %s119 = sphi 0, %s121
      %s122 = sphi 0, %s119
      %s123 = sphi 0, %s122
      %s139 = sphi 0, %s123
      %s145 = sphi 0, %s147
      %s148 = sphi 0, %s145
      %s149 = sphi 0, %s148
      %s165 = sphi 0, %s149
    $region4: #{tpu_custom_call.1} parent=1 // loop_header_branch
      %25 = sbr.rel (%p23) target = $region8
    $region5: #{tpu_custom_call.1} parent=1 // loop_body
      %s27 = ssub.s32 %s22, 1
      %s28 = ssub.s32 %s22, 2
      %s35 = sadd.s32 1, %s30
      %p36 = scmp.ge.s32.totalorder %s35, 2
      %s37 = scalar_select %p36, 0, %s35
      %s38 = sadd.s32 1, %s29
      %s39 = scalar_select %p36, %s38, %s29
      %p40 = scmp.ge.s32.totalorder %s39, 2
      %s41 = scalar_select %p40, 0, %s39
      %s42 = ssub.s32 %s29, %s41
      %s43 = ssub.s32 %s30, %s37
      %s44 = sor.u32 %s42, %s43
      %p45 = scmp.eq.s32.totalorder %s44, 0
      %s47 = sadd.s32 %s46, 1
      %s48 = scalar_select %p45, %s46, %s47
      %p51 = pneg %p45
      %p52 = scmp.eq.s32.totalorder %s22, 3
      %p53 = por %p51, %p52
      %p54 = scmp.ne.s32.totalorder %s46, %s49
      %p55 = scmp.eq.s32.totalorder %s22, 0
      %p56 = por %p54, %p55
      %p57 = scmp.ne.s32.totalorder %s46, %s49
      %p58 = scmp.eq.s32.totalorder %s27, 3
      %p59 = por %p57, %p58
      %p60 = scmp.ne.s32.totalorder %s49, %s50
      %p61 = scmp.eq.s32.totalorder %s27, 0
      %p62 = por %p60, %p61
      %p63 = scmp.ne.s32.totalorder %s49, %s50
      %p64 = scmp.eq.s32.totalorder %s28, 3
      %p65 = por %p63, %p64
      %p67 = scmp.ne.s32.totalorder %s50, %s66
      %p68 = scmp.eq.s32.totalorder %s28, 0
      %p69 = por %p67, %p68
      %s70 = ssub.s32 %s30, %s37
      %p71 = scmp.eq.s32.totalorder %s70, 0
      %s73 = sadd.s32 %s72, 1
      %s74 = scalar_select %p71, %s72, %s73
      %p77 = pneg %p71
      %p78 = scmp.eq.s32.totalorder %s22, 3
      %p79 = por %p77, %p78
      %p80 = scmp.ne.s32.totalorder %s72, %s75
      %p81 = scmp.eq.s32.totalorder %s22, 0
      %p82 = por %p80, %p81
      %p83 = scmp.ne.s32.totalorder %s72, %s75
      %p84 = scmp.eq.s32.totalorder %s27, 3
      %p85 = por %p83, %p84
      %p86 = scmp.ne.s32.totalorder %s75, %s76
      %p87 = scmp.eq.s32.totalorder %s27, 0
      %p88 = por %p86, %p87
      %p89 = scmp.ne.s32.totalorder %s75, %s76
      %p90 = scmp.eq.s32.totalorder %s28, 3
      %p91 = por %p89, %p90
      %p93 = scmp.ne.s32.totalorder %s76, %s92
      %p94 = scmp.eq.s32.totalorder %s28, 0
      %p95 = por %p93, %p94
      %s97 = sadd.s32 %s96, 1
      %p100 = scmp.eq.s32.totalorder %s22, 3
      %p101 = scmp.ne.s32.totalorder %s96, %s98
      %p102 = scmp.eq.s32.totalorder %s22, 0
      %p103 = por %p101, %p102
      %p104 = scmp.ne.s32.totalorder %s96, %s98
      %p105 = scmp.eq.s32.totalorder %s27, 3
      %p106 = por %p104, %p105
      %p107 = scmp.ne.s32.totalorder %s98, %s99
      %p108 = scmp.eq.s32.totalorder %s27, 0
      %p109 = por %p107, %p108
      %p110 = scmp.ne.s32.totalorder %s98, %s99
      %p111 = scmp.eq.s32.totalorder %s28, 3
      %p112 = por %p110, %p111
      %p114 = scmp.ne.s32.totalorder %s99, %s113
      %p115 = scmp.eq.s32.totalorder %s28, 0
      %p116 = por %p114, %p115
      %s117 = ssub.s32 %s29, %s41
      %p118 = scmp.eq.s32.totalorder %s117, 0
      %s120 = sadd.s32 %s119, 1
      %s121 = scalar_select %p118, %s119, %s120
      %p124 = pneg %p118
      %p125 = scmp.eq.s32.totalorder %s22, 3
      %p126 = por %p124, %p125
      %p127 = scmp.ne.s32.totalorder %s119, %s122
      %p128 = scmp.eq.s32.totalorder %s22, 0
      %p129 = por %p127, %p128
      %p130 = scmp.ne.s32.totalorder %s119, %s122
      %p131 = scmp.eq.s32.totalorder %s27, 3
      %p132 = por %p130, %p131
      %p133 = scmp.ne.s32.totalorder %s122, %s123
      %p134 = scmp.eq.s32.totalorder %s27, 0
      %p135 = por %p133, %p134
      %p136 = scmp.ne.s32.totalorder %s122, %s123
      %p137 = scmp.eq.s32.totalorder %s28, 3
      %p138 = por %p136, %p137
      %p140 = scmp.ne.s32.totalorder %s123, %s139
      %p141 = scmp.eq.s32.totalorder %s28, 0
      %p142 = por %p140, %p141
      %s143 = ssub.s32 %s29, %s41
      %p144 = scmp.eq.s32.totalorder %s143, 0
      %s146 = sadd.s32 %s145, 1
      %s147 = scalar_select %p144, %s145, %s146
      %p150 = pneg %p144
      %p151 = scmp.eq.s32.totalorder %s22, 3
      %p152 = por %p150, %p151
      %p153 = scmp.ne.s32.totalorder %s145, %s148
      %p154 = scmp.eq.s32.totalorder %s22, 0
      %p155 = por %p153, %p154
      %p156 = scmp.ne.s32.totalorder %s145, %s148
      %p157 = scmp.eq.s32.totalorder %s27, 3
      %p158 = por %p156, %p157
      %p159 = scmp.ne.s32.totalorder %s148, %s149
      %p160 = scmp.eq.s32.totalorder %s27, 0
      %p161 = por %p159, %p160
      %p162 = scmp.ne.s32.totalorder %s148, %s149
      %p163 = scmp.eq.s32.totalorder %s28, 3
      %p164 = por %p162, %p163
      %p166 = scmp.ne.s32.totalorder %s149, %s165
      %p167 = scmp.eq.s32.totalorder %s28, 0
      %p168 = por %p166, %p167
      %p169 = scmp.le.s32.totalorder 1, %s22
      %p170 = scmp.lt.s32.totalorder %s22, 5
      %p171 = pnand %p169, %p170
      %p172 = pneg %p171
      // Predicated region
      $region9: #{tpu_custom_call.1} parent=5 // pred_check
        _
      $region10: #{tpu_custom_call.1} parent=5 // pred_check_branch
        %174 = sbr.rel (%p171) target = $region12
      $region11: #{tpu_custom_call.1} parent=5 // pred_region
        %s175 = ssub.s32 %s22, 1
        // Predicated region
        $region13: #{tpu_custom_call.1} parent=11 // pred_check
          %p176 = pneg %p109
        $region14: #{tpu_custom_call.1} parent=11 // pred_check_branch
          %178 = sbr.rel (%p176) target = $region16
        $region15: #{tpu_custom_call.1} parent=11 // pred_region
          %180 = vsyncadd [#allocation7], 0
          %s182 = sshll.u32 %s2, 4
          %s183 = int_to_ptr.hbm [resolvable:$true] %s182
          %s184 = sshll.u32 [#allocation8], 4
          %s185 = int_to_ptr.vmem [resolvable:$true] %s184
          %187 = dma.hbm_to_vmem [thread:$0]  %s183, 16, %s185, [#allocation7]
        $region16: #{tpu_custom_call.1} parent=11 // pred_fallthru
          _
      $region12: #{tpu_custom_call.1} parent=5 // pred_fallthru
        _
      %p188 = scmp.lt.s32.totalorder %s22, 4
      // Predicated region
      $region17: #{tpu_custom_call.1} parent=5 // pred_check
        %p189 = pneg %p188
      $region18: #{tpu_custom_call.1} parent=5 // pred_check_branch
        %191 = sbr.rel (%p189) target = $region20
      $region19: #{tpu_custom_call.1} parent=5 // pred_region
        // Predicated region
        $region21: #{tpu_custom_call.1} parent=19 // pred_check
          %p192 = pneg %p56
        $region22: #{tpu_custom_call.1} parent=19 // pred_check_branch
          %194 = sbr.rel (%p192) target = $region24
        $region23: #{tpu_custom_call.1} parent=19 // pred_region
          %s195 = sand.u32 %s46, 1
          %s196 = scalar_lea.sflag [#allocation4], %s195
          %s197 = sand.u32 %s46, 1
          %s198 = smul.addr %s197, 832
          %s199 = scalar_lea.vmem [#allocation3], %s198
          %s200 = smul.u32 13, %s29
          %s201 = smul.u32 16, %s30
          %s202 = ssub.s32 25, %s200
          %p203 = scmp.lt.s32.totalorder %s202, 13
          %s204 = scalar_select %p203, %s202, 13
          %s205 = smul.u32 4, %s204
          %s206 = smul.u32 %s205, 16
          %s207 = ssub.s32 832, %s206
          %s208 = sshll.u32 %s207, 4
          %209 = vsyncadd %s196, %s208
          %p210 = scmp.ne.s32.totalorder 0, %s206
          %s211 = smul.addr %s200, 32
          %s212 = sadd.s32 %s201, %s211
          %s213 = smul.addr %s212, 4
          %s214 = scalar_lea.hbm %s0, %s213
          %s215 = smul.u32 64, %s204
          %s216 = sshll.u32 %s214, 4
          %s217 = int_to_ptr.hbm [resolvable:$true] %s216
          %s218 = sshll.u32 %s199, 4
          %s219 = int_to_ptr.vmem [resolvable:$true] %s218
          %s220 = sshll.u32 %s215, 4
          %224 = dma.hbm_to_vmem [thread:$0]  (%p210), %s217, %s220, %s219, %s196, 2048, 1024, 64
        $region24: #{tpu_custom_call.1} parent=19 // pred_fallthru
          _
        // Predicated region
        $region25: #{tpu_custom_call.1} parent=19 // pred_check
          %p225 = pneg %p82
        $region26: #{tpu_custom_call.1} parent=19 // pred_check_branch
          %227 = sbr.rel (%p225) target = $region28
        $region27: #{tpu_custom_call.1} parent=19 // pred_region
          %s228 = sand.u32 %s22, 1
          %s229 = scalar_lea.sflag [#allocation7], %s228
          %s230 = sand.u32 %s72, 1
          %s231 = smul.addr %s230, 1024
          %s232 = scalar_lea.vmem [#allocation6], %s231
          %s233 = smul.u32 256, %s30
          %235 = vsyncadd %s229, 0
          %s236 = smul.addr %s233, 4
          %s237 = scalar_lea.hbm %s1, %s236
          %s238 = sshll.u32 %s237, 4
          %s239 = int_to_ptr.hbm [resolvable:$true] %s238
          %s240 = sshll.u32 %s232, 4
          %s241 = int_to_ptr.vmem [resolvable:$true] %s240
          %246 = dma.hbm_to_vmem [thread:$0]  %s239, 16384, %s241, %s229, 64, 64, 4
        $region28: #{tpu_custom_call.1} parent=19 // pred_fallthru
          _
        // Predicated region
        $region29: #{tpu_custom_call.1} parent=19 // pred_check
          %p247 = pneg %p129
        $region30: #{tpu_custom_call.1} parent=19 // pred_check_branch
          %249 = sbr.rel (%p247) target = $region32
        $region31: #{tpu_custom_call.1} parent=19 // pred_region
          %s250 = sand.u32 %s119, 1
          %s251 = scalar_lea.sflag [#allocation10], %s250
          %s252 = sand.u32 %s119, 1
          %s253 = smul.addr %s252, 104
          %s254 = scalar_lea.vmem [#allocation9], %s253
          %s255 = smul.u32 13, %s29
          %s256 = ssub.s32 25, %s255
          %p257 = scmp.lt.s32.totalorder %s256, 13
          %s258 = scalar_select %p257, %s256, 13
          %s259 = smul.u32 8, %s258
          %s260 = ssub.s32 104, %s259
          %s261 = sshll.u32 %s260, 4
          %262 = vsyncadd %s251, %s261
          %p263 = scmp.ne.s32.totalorder 0, %s259
          %s264 = smul.addr %s255, 8
          %s265 = scalar_lea.hbm %s3, %s264
          %s266 = smul.u32 8, %s258
          %s267 = sshll.u32 %s265, 4
          %s268 = int_to_ptr.hbm [resolvable:$true] %s267
          %s269 = sshll.u32 %s254, 4
          %s270 = int_to_ptr.vmem [resolvable:$true] %s269
          %s271 = sshll.u32 %s266, 4
          %275 = dma.hbm_to_vmem [thread:$0]  (%p263), %s268, %s271, %s270, %s251, 128, 128, 8
        $region32: #{tpu_custom_call.1} parent=19 // pred_fallthru
          _
      $region20: #{tpu_custom_call.1} parent=5 // pred_fallthru
        _
      %p276 = scmp.le.s32.totalorder 1, %s22
      %p277 = scmp.lt.s32.totalorder %s22, 5
      %p278 = pnand %p276, %p277
      %p279 = pneg %p278
      // Predicated region
      $region33: #{tpu_custom_call.1} parent=5 // pred_check
        _
      $region34: #{tpu_custom_call.1} parent=5 // pred_check_branch
        %281 = sbr.rel (%p278) target = $region36
      $region35: #{tpu_custom_call.1} parent=5 // pred_region
        %s282 = ssub.s32 %s22, 1
        %s283 = sand.u32 %s49, 1
        %s284 = scalar_lea.sflag [#allocation4], %s283
        %s285 = sand.u32 %s49, 1
        %s286 = smul.addr %s285, 832
        %s287 = scalar_lea.vmem [#allocation3], %s286
        // Predicated region
        $region37: #{tpu_custom_call.1} parent=35 // pred_check
          %p288 = pneg %p62
        $region38: #{tpu_custom_call.1} parent=35 // pred_check_branch
          %290 = sbr.rel (%p288) target = $region40
        $region39: #{tpu_custom_call.1} parent=35 // pred_region
          %292 = dma.done %s284, 13312
        $region40: #{tpu_custom_call.1} parent=35 // pred_fallthru
          _
        %s293 = sand.u32 %s27, 1
        %s294 = scalar_lea.sflag [#allocation7], %s293
        %s295 = sand.u32 %s75, 1
        %s296 = smul.addr %s295, 1024
        %s297 = scalar_lea.vmem [#allocation6], %s296
        // Predicated region
        $region41: #{tpu_custom_call.1} parent=35 // pred_check
          %p298 = pneg %p88
        $region42: #{tpu_custom_call.1} parent=35 // pred_check_branch
          %300 = sbr.rel (%p298) target = $region44
        $region43: #{tpu_custom_call.1} parent=35 // pred_region
          %302 = dma.done %s294, 16384
        $region44: #{tpu_custom_call.1} parent=35 // pred_fallthru
          _
        // Predicated region
        $region45: #{tpu_custom_call.1} parent=35 // pred_check
          %p303 = pneg %p109
        $region46: #{tpu_custom_call.1} parent=35 // pred_check_branch
          %305 = sbr.rel (%p303) target = $region48
        $region47: #{tpu_custom_call.1} parent=35 // pred_region
          %307 = dma.done [#allocation7], 16
        $region48: #{tpu_custom_call.1} parent=35 // pred_fallthru
          _
        %s308 = sand.u32 %s122, 1
        %s309 = scalar_lea.sflag [#allocation10], %s308
        %s310 = sand.u32 %s122, 1
        %s311 = smul.addr %s310, 104
        %s312 = scalar_lea.vmem [#allocation9], %s311
        // Predicated region
        $region49: #{tpu_custom_call.1} parent=35 // pred_check
          %p313 = pneg %p135
        $region50: #{tpu_custom_call.1} parent=35 // pred_check_branch
          %315 = sbr.rel (%p313) target = $region52
        $region51: #{tpu_custom_call.1} parent=35 // pred_region
          %317 = dma.done %s309, 1664
        $region52: #{tpu_custom_call.1} parent=35 // pred_fallthru
          _
        %s318 = sand.u32 %s49, 1
        %s319 = scalar_lea.sflag [#allocation4], %s318
        %s320 = sand.u32 %s49, 1
        %s321 = smul.addr %s320, 832
        %s322 = scalar_lea.vmem [#allocation3], %s321
        %p323 = pneg %p62
        %p324 = pneg %p59
        %s325 = sand.u32 %s27, 1
        %s326 = scalar_lea.sflag [#allocation7], %s325
        %s327 = sand.u32 %s75, 1
        %s328 = smul.addr %s327, 1024
        %s329 = scalar_lea.vmem [#allocation6], %s328
        %p330 = pneg %p88
        %p331 = pneg %p85
        %p332 = pneg %p109
        %p333 = pneg %p106
        %s334 = sand.u32 %s122, 1
        %s335 = scalar_lea.sflag [#allocation10], %s334
        %s336 = sand.u32 %s122, 1
        %s337 = smul.addr %s336, 104
        %s338 = scalar_lea.vmem [#allocation9], %s337
        %p339 = pneg %p135
        %p340 = pneg %p132
        %p341 = pneg %p161
        %p342 = pneg %p158
        %s343 = sand.u32 %s148, 1
        %s344 = scalar_lea.sflag [#allocation5], %s343
        %s345 = sand.u32 %s148, 1
        %s346 = smul.addr %s345, 104
        %s347 = scalar_lea.vmem [#allocation11], %s346
        %s348 = smul.u32 13, %s31
        %s349 = smul.u32 16, %s32
        %s350 = ssub.s32 25, %s348
        %p351 = scmp.lt.s32.totalorder %s350, 13
        %s352 = scalar_select %p351, %s350, 13
        %s353 = smul.u32 4, %s352
        %s354 = smul.u32 %s353, 16
        %s355 = smul.u32 256, %s32
        %s356 = smul.u32 13, %s31
        %s357 = ssub.s32 25, %s356
        %p358 = scmp.lt.s32.totalorder %s357, 13
        %s359 = scalar_select %p358, %s357, 13
        %s360 = smul.u32 8, %s359
        %s361 = smul.u32 13, %s31
        %s362 = ssub.s32 25, %s361
        %p363 = scmp.lt.s32.totalorder %s362, 13
        %s364 = scalar_select %p363, %s362, 13
        %s365 = smul.u32 8, %s364
        %p366 = scmp.eq.s32.totalorder %s32, 0
        // Predicated region
        $region53: #{tpu_custom_call.1} parent=35 // pred_check
          %p367 = pneg %p366
        $region54: #{tpu_custom_call.1} parent=35 // pred_check_branch
          %369 = sbr.rel (%p367) target = $region56
        $region55: #{tpu_custom_call.1} parent=35 // pred_region
          %370 = vst [vmem:[#allocation2] sm:$0xff] 0.0
          %371 = vst [vmem:[#allocation2 + $0x8] sm:$0xff] 0.0
          %372 = vst [vmem:[#allocation2 + $0x10] sm:$0xff] 0.0
          %373 = vst [vmem:[#allocation2 + $0x18] sm:$0xff] 0.0
          %374 = vst [vmem:[#allocation2 + $0x20] sm:$0xff] 0.0
          %375 = vst [vmem:[#allocation2 + $0x28] sm:$0xff] 0.0
          %376 = vst [vmem:[#allocation2 + $0x30] sm:$0xff] 0.0
          %377 = vst [vmem:[#allocation2 + $0x38] sm:$0xff] 0.0
          %378 = vst [vmem:[#allocation2 + $0x40] sm:$0xff] 0.0
          %379 = vst [vmem:[#allocation2 + $0x48] sm:$0xff] 0.0
          %380 = vst [vmem:[#allocation2 + $0x50] sm:$0xff] 0.0
          %381 = vst [vmem:[#allocation2 + $0x58] sm:$0xff] 0.0
          %382 = vst [vmem:[#allocation2 + $0x60] sm:$0xff] 0.0
        $region56: #{tpu_custom_call.1} parent=35 // pred_fallthru
          _
        %v383 = vld [vmem:[#allocation2] sm:$0xff]
        %v384 = vld [vmem:[#allocation2 + $0x8] sm:$0xff]
        %v385 = vld [vmem:[#allocation2 + $0x10] sm:$0xff]
        %v386 = vld [vmem:[#allocation2 + $0x18] sm:$0xff]
        %v387 = vld [vmem:[#allocation2 + $0x20] sm:$0xff]
        %v388 = vld [vmem:[#allocation2 + $0x28] sm:$0xff]
        %v389 = vld [vmem:[#allocation2 + $0x30] sm:$0xff]
        %v390 = vld [vmem:[#allocation2 + $0x38] sm:$0xff]
        %v391 = vld [vmem:[#allocation2 + $0x40] sm:$0xff]
        %v392 = vld [vmem:[#allocation2 + $0x48] sm:$0xff]
        %v393 = vld [vmem:[#allocation2 + $0x50] sm:$0xff]
        %v394 = vld [vmem:[#allocation2 + $0x58] sm:$0xff]
        %v395 = vld [vmem:[#allocation2 + $0x60] sm:$0xff]
        %v396 = vld [vmem:[%s287] sm:$0xff]
        %v397 = vld [vmem:[%s287 + $0x8] sm:$0xff]
        %v398 = vld [vmem:[%s287 + $0x10] sm:$0xff]
        %v399 = vld [vmem:[%s287 + $0x18] sm:$0xff]
        %v400 = vld [vmem:[%s287 + $0x20] sm:$0xff]
        %v401 = vld [vmem:[%s287 + $0x28] sm:$0xff]
        %v402 = vld [vmem:[%s287 + $0x30] sm:$0xff]
        %v403 = vld [vmem:[%s287 + $0x38] sm:$0xff]
        %v404 = vld [vmem:[%s287 + $0x40] sm:$0xff]
        %v405 = vld [vmem:[%s287 + $0x48] sm:$0xff]
        %v406 = vld [vmem:[%s287 + $0x50] sm:$0xff]
        %v407 = vld [vmem:[%s287 + $0x58] sm:$0xff]
        %v408 = vld [vmem:[%s287 + $0x60] sm:$0xff]
        %v409 = vld [vmem:[%s287 + $0x68] sm:$0xff]
        %v410 = vld [vmem:[%s287 + $0x70] sm:$0xff]
        %v411 = vld [vmem:[%s287 + $0x78] sm:$0xff]
        %v412 = vld [vmem:[%s287 + $0x80] sm:$0xff]
        %v413 = vld [vmem:[%s287 + $0x88] sm:$0xff]
        %v414 = vld [vmem:[%s287 + $0x90] sm:$0xff]
        %v415 = vld [vmem:[%s287 + $0x98] sm:$0xff]
        %v416 = vld [vmem:[%s287 + $0xa0] sm:$0xff]
        %v417 = vld [vmem:[%s287 + $0xa8] sm:$0xff]
        %v418 = vld [vmem:[%s287 + $0xb0] sm:$0xff]
        %v419 = vld [vmem:[%s287 + $0xb8] sm:$0xff]
        %v420 = vld [vmem:[%s287 + $0xc0] sm:$0xff]
        %v421 = vld [vmem:[%s287 + $0xc8] sm:$0xff]
        %v422 = vld [vmem:[%s287 + $0xd0] sm:$0xff]
        %v423 = vld [vmem:[%s287 + $0xd8] sm:$0xff]
        %v424 = vld [vmem:[%s287 + $0xe0] sm:$0xff]
        %v425 = vld [vmem:[%s287 + $0xe8] sm:$0xff]
        %v426 = vld [vmem:[%s287 + $0xf0] sm:$0xff]
        %v427 = vld [vmem:[%s287 + $0xf8] sm:$0xff]
        %v428 = vld [vmem:[%s287 + $0x100] sm:$0xff]
        %v429 = vld [vmem:[%s287 + $0x108] sm:$0xff]
        %v430 = vld [vmem:[%s287 + $0x110] sm:$0xff]
        %v431 = vld [vmem:[%s287 + $0x118] sm:$0xff]
        %v432 = vld [vmem:[%s287 + $0x120] sm:$0xff]
        %v433 = vld [vmem:[%s287 + $0x128] sm:$0xff]
        %v434 = vld [vmem:[%s287 + $0x130] sm:$0xff]
        %v435 = vld [vmem:[%s287 + $0x138] sm:$0xff]
        %v436 = vld [vmem:[%s287 + $0x140] sm:$0xff]
        %v437 = vld [vmem:[%s287 + $0x148] sm:$0xff]
        %v438 = vld [vmem:[%s287 + $0x150] sm:$0xff]
        %v439 = vld [vmem:[%s287 + $0x158] sm:$0xff]
        %v440 = vld [vmem:[%s287 + $0x160] sm:$0xff]
        %v441 = vld [vmem:[%s287 + $0x168] sm:$0xff]
        %v442 = vld [vmem:[%s287 + $0x170] sm:$0xff]
        %v443 = vld [vmem:[%s287 + $0x178] sm:$0xff]
        %v444 = vld [vmem:[%s287 + $0x180] sm:$0xff]
        %v445 = vld [vmem:[%s287 + $0x188] sm:$0xff]
        %v446 = vld [vmem:[%s287 + $0x190] sm:$0xff]
        %v447 = vld [vmem:[%s287 + $0x198] sm:$0xff]
        %v448 = vld [vmem:[%s287 + $0x1a0] sm:$0xff]
        %v449 = vld [vmem:[%s287 + $0x1a8] sm:$0xff]
        %v450 = vld [vmem:[%s287 + $0x1b0] sm:$0xff]
        %v451 = vld [vmem:[%s287 + $0x1b8] sm:$0xff]
        %v452 = vld [vmem:[%s287 + $0x1c0] sm:$0xff]
        %v453 = vld [vmem:[%s287 + $0x1c8] sm:$0xff]
        %v454 = vld [vmem:[%s287 + $0x1d0] sm:$0xff]
        %v455 = vld [vmem:[%s287 + $0x1d8] sm:$0xff]
        %v456 = vld [vmem:[%s287 + $0x1e0] sm:$0xff]
        %v457 = vld [vmem:[%s287 + $0x1e8] sm:$0xff]
        %v458 = vld [vmem:[%s287 + $0x1f0] sm:$0xff]
        %v459 = vld [vmem:[%s287 + $0x1f8] sm:$0xff]
        %v460 = vld [vmem:[%s287 + $0x200] sm:$0xff]
        %v461 = vld [vmem:[%s287 + $0x208] sm:$0xff]
        %v462 = vld [vmem:[%s287 + $0x210] sm:$0xff]
        %v463 = vld [vmem:[%s287 + $0x218] sm:$0xff]
        %v464 = vld [vmem:[%s287 + $0x220] sm:$0xff]
        %v465 = vld [vmem:[%s287 + $0x228] sm:$0xff]
        %v466 = vld [vmem:[%s287 + $0x230] sm:$0xff]
        %v467 = vld [vmem:[%s287 + $0x238] sm:$0xff]
        %v468 = vld [vmem:[%s287 + $0x240] sm:$0xff]
        %v469 = vld [vmem:[%s287 + $0x248] sm:$0xff]
        %v470 = vld [vmem:[%s287 + $0x250] sm:$0xff]
        %v471 = vld [vmem:[%s287 + $0x258] sm:$0xff]
        %v472 = vld [vmem:[%s287 + $0x260] sm:$0xff]
        %v473 = vld [vmem:[%s287 + $0x268] sm:$0xff]
        %v474 = vld [vmem:[%s287 + $0x270] sm:$0xff]
        %v475 = vld [vmem:[%s287 + $0x278] sm:$0xff]
        %v476 = vld [vmem:[%s287 + $0x280] sm:$0xff]
        %v477 = vld [vmem:[%s287 + $0x288] sm:$0xff]
        %v478 = vld [vmem:[%s287 + $0x290] sm:$0xff]
        %v479 = vld [vmem:[%s287 + $0x298] sm:$0xff]
        %v480 = vld [vmem:[%s287 + $0x2a0] sm:$0xff]
        %v481 = vld [vmem:[%s287 + $0x2a8] sm:$0xff]
        %v482 = vld [vmem:[%s287 + $0x2b0] sm:$0xff]
        %v483 = vld [vmem:[%s287 + $0x2b8] sm:$0xff]
        %v484 = vld [vmem:[%s287 + $0x2c0] sm:$0xff]
        %v485 = vld [vmem:[%s287 + $0x2c8] sm:$0xff]
        %v486 = vld [vmem:[%s287 + $0x2d0] sm:$0xff]
        %v487 = vld [vmem:[%s287 + $0x2d8] sm:$0xff]
        %v488 = vld [vmem:[%s287 + $0x2e0] sm:$0xff]
        %v489 = vld [vmem:[%s287 + $0x2e8] sm:$0xff]
        %v490 = vld [vmem:[%s287 + $0x2f0] sm:$0xff]
        %v491 = vld [vmem:[%s287 + $0x2f8] sm:$0xff]
        %v492 = vld [vmem:[%s287 + $0x300] sm:$0xff]
        %v493 = vld [vmem:[%s287 + $0x308] sm:$0xff]
        %v494 = vld [vmem:[%s287 + $0x310] sm:$0xff]
        %v495 = vld [vmem:[%s287 + $0x318] sm:$0xff]
        %v496 = vld [vmem:[%s287 + $0x320] sm:$0xff]
        %v497 = vld [vmem:[%s287 + $0x328] sm:$0xff]
        %v498 = vld [vmem:[%s287 + $0x330] sm:$0xff]
        %v499 = vld [vmem:[%s287 + $0x338] sm:$0xff]
        %v500 = vld [vmem:[%s297] sm:$0xf]
        %v501 = vld [vmem:[%s297 + $0x4] sm:$0xf]
        %v502 = vld [vmem:[%s297 + $0x8] sm:$0xf]
        %v503 = vld [vmem:[%s297 + $0xc] sm:$0xf]
        %v504 = vld [vmem:[%s297 + $0x10] sm:$0xf]
        %v505 = vld [vmem:[%s297 + $0x14] sm:$0xf]
        %v506 = vld [vmem:[%s297 + $0x18] sm:$0xf]
        %v507 = vld [vmem:[%s297 + $0x1c] sm:$0xf]
        %v508 = vld [vmem:[%s297 + $0x20] sm:$0xf]
        %v509 = vld [vmem:[%s297 + $0x24] sm:$0xf]
        %v510 = vld [vmem:[%s297 + $0x28] sm:$0xf]
        %v511 = vld [vmem:[%s297 + $0x2c] sm:$0xf]
        %v512 = vld [vmem:[%s297 + $0x30] sm:$0xf]
        %v513 = vld [vmem:[%s297 + $0x34] sm:$0xf]
        %v514 = vld [vmem:[%s297 + $0x38] sm:$0xf]
        %v515 = vld [vmem:[%s297 + $0x3c] sm:$0xf]
        %v516 = vld [vmem:[%s297 + $0x40] sm:$0xf]
        %v517 = vld [vmem:[%s297 + $0x44] sm:$0xf]
        %v518 = vld [vmem:[%s297 + $0x48] sm:$0xf]
        %v519 = vld [vmem:[%s297 + $0x4c] sm:$0xf]
        %v520 = vld [vmem:[%s297 + $0x50] sm:$0xf]
        %v521 = vld [vmem:[%s297 + $0x54] sm:$0xf]
        %v522 = vld [vmem:[%s297 + $0x58] sm:$0xf]
        %v523 = vld [vmem:[%s297 + $0x5c] sm:$0xf]
        %v524 = vld [vmem:[%s297 + $0x60] sm:$0xf]
        %v525 = vld [vmem:[%s297 + $0x64] sm:$0xf]
        %v526 = vld [vmem:[%s297 + $0x68] sm:$0xf]
        %v527 = vld [vmem:[%s297 + $0x6c] sm:$0xf]
        %v528 = vld [vmem:[%s297 + $0x70] sm:$0xf]
        %v529 = vld [vmem:[%s297 + $0x74] sm:$0xf]
        %v530 = vld [vmem:[%s297 + $0x78] sm:$0xf]
        %v531 = vld [vmem:[%s297 + $0x7c] sm:$0xf]
        %v532 = vld [vmem:[%s297 + $0x80] sm:$0xf]
        %v533 = vld [vmem:[%s297 + $0x84] sm:$0xf]
        %v534 = vld [vmem:[%s297 + $0x88] sm:$0xf]
        %v535 = vld [vmem:[%s297 + $0x8c] sm:$0xf]
        %v536 = vld [vmem:[%s297 + $0x90] sm:$0xf]
        %v537 = vld [vmem:[%s297 + $0x94] sm:$0xf]
        %v538 = vld [vmem:[%s297 + $0x98] sm:$0xf]
        %v539 = vld [vmem:[%s297 + $0x9c] sm:$0xf]
        %v540 = vld [vmem:[%s297 + $0xa0] sm:$0xf]
        %v541 = vld [vmem:[%s297 + $0xa4] sm:$0xf]
        %v542 = vld [vmem:[%s297 + $0xa8] sm:$0xf]
        %v543 = vld [vmem:[%s297 + $0xac] sm:$0xf]
        %v544 = vld [vmem:[%s297 + $0xb0] sm:$0xf]
        %v545 = vld [vmem:[%s297 + $0xb4] sm:$0xf]
        %v546 = vld [vmem:[%s297 + $0xb8] sm:$0xf]
        %v547 = vld [vmem:[%s297 + $0xbc] sm:$0xf]
        %v548 = vld [vmem:[%s297 + $0xc0] sm:$0xf]
        %v549 = vld [vmem:[%s297 + $0xc4] sm:$0xf]
        %v550 = vld [vmem:[%s297 + $0xc8] sm:$0xf]
        %v551 = vld [vmem:[%s297 + $0xcc] sm:$0xf]
        %v552 = vld [vmem:[%s297 + $0xd0] sm:$0xf]
        %v553 = vld [vmem:[%s297 + $0xd4] sm:$0xf]
        %v554 = vld [vmem:[%s297 + $0xd8] sm:$0xf]
        %v555 = vld [vmem:[%s297 + $0xdc] sm:$0xf]
        %v556 = vld [vmem:[%s297 + $0xe0] sm:$0xf]
        %v557 = vld [vmem:[%s297 + $0xe4] sm:$0xf]
        %v558 = vld [vmem:[%s297 + $0xe8] sm:$0xf]
        %v559 = vld [vmem:[%s297 + $0xec] sm:$0xf]
        %v560 = vld [vmem:[%s297 + $0xf0] sm:$0xf]
        %v561 = vld [vmem:[%s297 + $0xf4] sm:$0xf]
        %v562 = vld [vmem:[%s297 + $0xf8] sm:$0xf]
        %v563 = vld [vmem:[%s297 + $0xfc] sm:$0xf]
        %v564 = vld [vmem:[%s297 + $0x100] sm:$0xf]
        %v565 = vld [vmem:[%s297 + $0x104] sm:$0xf]
        %v566 = vld [vmem:[%s297 + $0x108] sm:$0xf]
        %v567 = vld [vmem:[%s297 + $0x10c] sm:$0xf]
        %v568 = vld [vmem:[%s297 + $0x110] sm:$0xf]
        %v569 = vld [vmem:[%s297 + $0x114] sm:$0xf]
        %v570 = vld [vmem:[%s297 + $0x118] sm:$0xf]
        %v571 = vld [vmem:[%s297 + $0x11c] sm:$0xf]
        %v572 = vld [vmem:[%s297 + $0x120] sm:$0xf]
        %v573 = vld [vmem:[%s297 + $0x124] sm:$0xf]
        %v574 = vld [vmem:[%s297 + $0x128] sm:$0xf]
        %v575 = vld [vmem:[%s297 + $0x12c] sm:$0xf]
        %v576 = vld [vmem:[%s297 + $0x130] sm:$0xf]
        %v577 = vld [vmem:[%s297 + $0x134] sm:$0xf]
        %v578 = vld [vmem:[%s297 + $0x138] sm:$0xf]
        %v579 = vld [vmem:[%s297 + $0x13c] sm:$0xf]
        %v580 = vld [vmem:[%s297 + $0x140] sm:$0xf]
        %v581 = vld [vmem:[%s297 + $0x144] sm:$0xf]
        %v582 = vld [vmem:[%s297 + $0x148] sm:$0xf]
        %v583 = vld [vmem:[%s297 + $0x14c] sm:$0xf]
        %v584 = vld [vmem:[%s297 + $0x150] sm:$0xf]
        %v585 = vld [vmem:[%s297 + $0x154] sm:$0xf]
        %v586 = vld [vmem:[%s297 + $0x158] sm:$0xf]
        %v587 = vld [vmem:[%s297 + $0x15c] sm:$0xf]
        %v588 = vld [vmem:[%s297 + $0x160] sm:$0xf]
        %v589 = vld [vmem:[%s297 + $0x164] sm:$0xf]
        %v590 = vld [vmem:[%s297 + $0x168] sm:$0xf]
        %v591 = vld [vmem:[%s297 + $0x16c] sm:$0xf]
        %v592 = vld [vmem:[%s297 + $0x170] sm:$0xf]
        %v593 = vld [vmem:[%s297 + $0x174] sm:$0xf]
        %v594 = vld [vmem:[%s297 + $0x178] sm:$0xf]
        %v595 = vld [vmem:[%s297 + $0x17c] sm:$0xf]
        %v596 = vld [vmem:[%s297 + $0x180] sm:$0xf]
        %v597 = vld [vmem:[%s297 + $0x184] sm:$0xf]
        %v598 = vld [vmem:[%s297 + $0x188] sm:$0xf]
        %v599 = vld [vmem:[%s297 + $0x18c] sm:$0xf]
        %v600 = vld [vmem:[%s297 + $0x190] sm:$0xf]
        %v601 = vld [vmem:[%s297 + $0x194] sm:$0xf]
        %v602 = vld [vmem:[%s297 + $0x198] sm:$0xf]
        %v603 = vld [vmem:[%s297 + $0x19c] sm:$0xf]
        %v604 = vld [vmem:[%s297 + $0x1a0] sm:$0xf]
        %v605 = vld [vmem:[%s297 + $0x1a4] sm:$0xf]
        %v606 = vld [vmem:[%s297 + $0x1a8] sm:$0xf]
        %v607 = vld [vmem:[%s297 + $0x1ac] sm:$0xf]
        %v608 = vld [vmem:[%s297 + $0x1b0] sm:$0xf]
        %v609 = vld [vmem:[%s297 + $0x1b4] sm:$0xf]
        %v610 = vld [vmem:[%s297 + $0x1b8] sm:$0xf]
        %v611 = vld [vmem:[%s297 + $0x1bc] sm:$0xf]
        %v612 = vld [vmem:[%s297 + $0x1c0] sm:$0xf]
        %v613 = vld [vmem:[%s297 + $0x1c4] sm:$0xf]
        %v614 = vld [vmem:[%s297 + $0x1c8] sm:$0xf]
        %v615 = vld [vmem:[%s297 + $0x1cc] sm:$0xf]
        %v616 = vld [vmem:[%s297 + $0x1d0] sm:$0xf]
        %v617 = vld [vmem:[%s297 + $0x1d4] sm:$0xf]
        %v618 = vld [vmem:[%s297 + $0x1d8] sm:$0xf]
        %v619 = vld [vmem:[%s297 + $0x1dc] sm:$0xf]
        %v620 = vld [vmem:[%s297 + $0x1e0] sm:$0xf]
        %v621 = vld [vmem:[%s297 + $0x1e4] sm:$0xf]
        %v622 = vld [vmem:[%s297 + $0x1e8] sm:$0xf]
        %v623 = vld [vmem:[%s297 + $0x1ec] sm:$0xf]
        %v624 = vld [vmem:[%s297 + $0x1f0] sm:$0xf]
        %v625 = vld [vmem:[%s297 + $0x1f4] sm:$0xf]
        %v626 = vld [vmem:[%s297 + $0x1f8] sm:$0xf]
        %v627 = vld [vmem:[%s297 + $0x1fc] sm:$0xf]
        %v628 = vld [vmem:[%s297 + $0x200] sm:$0xf]
        %v629 = vld [vmem:[%s297 + $0x204] sm:$0xf]
        %v630 = vld [vmem:[%s297 + $0x208] sm:$0xf]
        %v631 = vld [vmem:[%s297 + $0x20c] sm:$0xf]
        %v632 = vld [vmem:[%s297 + $0x210] sm:$0xf]
        %v633 = vld [vmem:[%s297 + $0x214] sm:$0xf]
        %v634 = vld [vmem:[%s297 + $0x218] sm:$0xf]
        %v635 = vld [vmem:[%s297 + $0x21c] sm:$0xf]
        %v636 = vld [vmem:[%s297 + $0x220] sm:$0xf]
        %v637 = vld [vmem:[%s297 + $0x224] sm:$0xf]
        %v638 = vld [vmem:[%s297 + $0x228] sm:$0xf]
        %v639 = vld [vmem:[%s297 + $0x22c] sm:$0xf]
        %v640 = vld [vmem:[%s297 + $0x230] sm:$0xf]
        %v641 = vld [vmem:[%s297 + $0x234] sm:$0xf]
        %v642 = vld [vmem:[%s297 + $0x238] sm:$0xf]
        %v643 = vld [vmem:[%s297 + $0x23c] sm:$0xf]
        %v644 = vld [vmem:[%s297 + $0x240] sm:$0xf]
        %v645 = vld [vmem:[%s297 + $0x244] sm:$0xf]
        %v646 = vld [vmem:[%s297 + $0x248] sm:$0xf]
        %v647 = vld [vmem:[%s297 + $0x24c] sm:$0xf]
        %v648 = vld [vmem:[%s297 + $0x250] sm:$0xf]
        %v649 = vld [vmem:[%s297 + $0x254] sm:$0xf]
        %v650 = vld [vmem:[%s297 + $0x258] sm:$0xf]
        %v651 = vld [vmem:[%s297 + $0x25c] sm:$0xf]
        %v652 = vld [vmem:[%s297 + $0x260] sm:$0xf]
        %v653 = vld [vmem:[%s297 + $0x264] sm:$0xf]
        %v654 = vld [vmem:[%s297 + $0x268] sm:$0xf]
        %v655 = vld [vmem:[%s297 + $0x26c] sm:$0xf]
        %v656 = vld [vmem:[%s297 + $0x270] sm:$0xf]
        %v657 = vld [vmem:[%s297 + $0x274] sm:$0xf]
        %v658 = vld [vmem:[%s297 + $0x278] sm:$0xf]
        %v659 = vld [vmem:[%s297 + $0x27c] sm:$0xf]
        %v660 = vld [vmem:[%s297 + $0x280] sm:$0xf]
        %v661 = vld [vmem:[%s297 + $0x284] sm:$0xf]
        %v662 = vld [vmem:[%s297 + $0x288] sm:$0xf]
        %v663 = vld [vmem:[%s297 + $0x28c] sm:$0xf]
        %v664 = vld [vmem:[%s297 + $0x290] sm:$0xf]
        %v665 = vld [vmem:[%s297 + $0x294] sm:$0xf]
        %v666 = vld [vmem:[%s297 + $0x298] sm:$0xf]
        %v667 = vld [vmem:[%s297 + $0x29c] sm:$0xf]
        %v668 = vld [vmem:[%s297 + $0x2a0] sm:$0xf]
        %v669 = vld [vmem:[%s297 + $0x2a4] sm:$0xf]
        %v670 = vld [vmem:[%s297 + $0x2a8] sm:$0xf]
        %v671 = vld [vmem:[%s297 + $0x2ac] sm:$0xf]
        %v672 = vld [vmem:[%s297 + $0x2b0] sm:$0xf]
        %v673 = vld [vmem:[%s297 + $0x2b4] sm:$0xf]
        %v674 = vld [vmem:[%s297 + $0x2b8] sm:$0xf]
        %v675 = vld [vmem:[%s297 + $0x2bc] sm:$0xf]
        %v676 = vld [vmem:[%s297 + $0x2c0] sm:$0xf]
        %v677 = vld [vmem:[%s297 + $0x2c4] sm:$0xf]
        %v678 = vld [vmem:[%s297 + $0x2c8] sm:$0xf]
        %v679 = vld [vmem:[%s297 + $0x2cc] sm:$0xf]
        %v680 = vld [vmem:[%s297 + $0x2d0] sm:$0xf]
        %v681 = vld [vmem:[%s297 + $0x2d4] sm:$0xf]
        %v682 = vld [vmem:[%s297 + $0x2d8] sm:$0xf]
        %v683 = vld [vmem:[%s297 + $0x2dc] sm:$0xf]
        %v684 = vld [vmem:[%s297 + $0x2e0] sm:$0xf]
        %v685 = vld [vmem:[%s297 + $0x2e4] sm:$0xf]
        %v686 = vld [vmem:[%s297 + $0x2e8] sm:$0xf]
        %v687 = vld [vmem:[%s297 + $0x2ec] sm:$0xf]
        %v688 = vld [vmem:[%s297 + $0x2f0] sm:$0xf]
        %v689 = vld [vmem:[%s297 + $0x2f4] sm:$0xf]
        %v690 = vld [vmem:[%s297 + $0x2f8] sm:$0xf]
        %v691 = vld [vmem:[%s297 + $0x2fc] sm:$0xf]
        %v692 = vld [vmem:[%s297 + $0x300] sm:$0xf]
        %v693 = vld [vmem:[%s297 + $0x304] sm:$0xf]
        %v694 = vld [vmem:[%s297 + $0x308] sm:$0xf]
        %v695 = vld [vmem:[%s297 + $0x30c] sm:$0xf]
        %v696 = vld [vmem:[%s297 + $0x310] sm:$0xf]
        %v697 = vld [vmem:[%s297 + $0x314] sm:$0xf]
        %v698 = vld [vmem:[%s297 + $0x318] sm:$0xf]
        %v699 = vld [vmem:[%s297 + $0x31c] sm:$0xf]
        %v700 = vld [vmem:[%s297 + $0x320] sm:$0xf]
        %v701 = vld [vmem:[%s297 + $0x324] sm:$0xf]
        %v702 = vld [vmem:[%s297 + $0x328] sm:$0xf]
        %v703 = vld [vmem:[%s297 + $0x32c] sm:$0xf]
        %v704 = vld [vmem:[%s297 + $0x330] sm:$0xf]
        %v705 = vld [vmem:[%s297 + $0x334] sm:$0xf]
        %v706 = vld [vmem:[%s297 + $0x338] sm:$0xf]
        %v707 = vld [vmem:[%s297 + $0x33c] sm:$0xf]
        %v708 = vld [vmem:[%s297 + $0x340] sm:$0xf]
        %v709 = vld [vmem:[%s297 + $0x344] sm:$0xf]
        %v710 = vld [vmem:[%s297 + $0x348] sm:$0xf]
        %v711 = vld [vmem:[%s297 + $0x34c] sm:$0xf]
        %v712 = vld [vmem:[%s297 + $0x350] sm:$0xf]
        %v713 = vld [vmem:[%s297 + $0x354] sm:$0xf]
        %v714 = vld [vmem:[%s297 + $0x358] sm:$0xf]
        %v715 = vld [vmem:[%s297 + $0x35c] sm:$0xf]
        %v716 = vld [vmem:[%s297 + $0x360] sm:$0xf]
        %v717 = vld [vmem:[%s297 + $0x364] sm:$0xf]
        %v718 = vld [vmem:[%s297 + $0x368] sm:$0xf]
        %v719 = vld [vmem:[%s297 + $0x36c] sm:$0xf]
        %v720 = vld [vmem:[%s297 + $0x370] sm:$0xf]
        %v721 = vld [vmem:[%s297 + $0x374] sm:$0xf]
        %v722 = vld [vmem:[%s297 + $0x378] sm:$0xf]
        %v723 = vld [vmem:[%s297 + $0x37c] sm:$0xf]
        %v724 = vld [vmem:[%s297 + $0x380] sm:$0xf]
        %v725 = vld [vmem:[%s297 + $0x384] sm:$0xf]
        %v726 = vld [vmem:[%s297 + $0x388] sm:$0xf]
        %v727 = vld [vmem:[%s297 + $0x38c] sm:$0xf]
        %v728 = vld [vmem:[%s297 + $0x390] sm:$0xf]
        %v729 = vld [vmem:[%s297 + $0x394] sm:$0xf]
        %v730 = vld [vmem:[%s297 + $0x398] sm:$0xf]
        %v731 = vld [vmem:[%s297 + $0x39c] sm:$0xf]
        %v732 = vld [vmem:[%s297 + $0x3a0] sm:$0xf]
        %v733 = vld [vmem:[%s297 + $0x3a4] sm:$0xf]
        %v734 = vld [vmem:[%s297 + $0x3a8] sm:$0xf]
        %v735 = vld [vmem:[%s297 + $0x3ac] sm:$0xf]
        %v736 = vld [vmem:[%s297 + $0x3b0] sm:$0xf]
        %v737 = vld [vmem:[%s297 + $0x3b4] sm:$0xf]
        %v738 = vld [vmem:[%s297 + $0x3b8] sm:$0xf]
        %v739 = vld [vmem:[%s297 + $0x3bc] sm:$0xf]
        %v740 = vld [vmem:[%s297 + $0x3c0] sm:$0xf]
        %v741 = vld [vmem:[%s297 + $0x3c4] sm:$0xf]
        %v742 = vld [vmem:[%s297 + $0x3c8] sm:$0xf]
        %v743 = vld [vmem:[%s297 + $0x3cc] sm:$0xf]
        %v744 = vld [vmem:[%s297 + $0x3d0] sm:$0xf]
        %v745 = vld [vmem:[%s297 + $0x3d4] sm:$0xf]
        %v746 = vld [vmem:[%s297 + $0x3d8] sm:$0xf]
        %v747 = vld [vmem:[%s297 + $0x3dc] sm:$0xf]
        %v748 = vld [vmem:[%s297 + $0x3e0] sm:$0xf]
        %v749 = vld [vmem:[%s297 + $0x3e4] sm:$0xf]
        %v750 = vld [vmem:[%s297 + $0x3e8] sm:$0xf]
        %v751 = vld [vmem:[%s297 + $0x3ec] sm:$0xf]
        %v752 = vld [vmem:[%s297 + $0x3f0] sm:$0xf]
        %v753 = vld [vmem:[%s297 + $0x3f4] sm:$0xf]
        %v754 = vld [vmem:[%s297 + $0x3f8] sm:$0xf]
        %v755 = vld [vmem:[%s297 + $0x3fc] sm:$0xf]
        %v860 = vunpack.c.l.b16 %v396
        %v861 = vunpack.c.h.b16 %v396
        %v862 = vunpack.c.l.b16 %v397
        %v863 = vunpack.c.h.b16 %v397
        %v864 = vunpack.c.l.b16 %v398
        %v865 = vunpack.c.h.b16 %v398
        %v866 = vunpack.c.l.b16 %v399
        %v867 = vunpack.c.h.b16 %v399
        %v868 = vunpack.c.l.b16 %v400
        %v869 = vunpack.c.h.b16 %v400
        %v870 = vunpack.c.l.b16 %v401
        %v871 = vunpack.c.h.b16 %v401
        %v872 = vunpack.c.l.b16 %v402
        %v873 = vunpack.c.h.b16 %v402
        %v874 = vunpack.c.l.b16 %v403
        %v875 = vunpack.c.h.b16 %v403
        %v876 = vunpack.c.l.b16 %v404
        %v877 = vunpack.c.h.b16 %v404
        %v878 = vunpack.c.l.b16 %v405
        %v879 = vunpack.c.h.b16 %v405
        %v880 = vunpack.c.l.b16 %v406
        %v881 = vunpack.c.h.b16 %v406
        %v882 = vunpack.c.l.b16 %v407
        %v883 = vunpack.c.h.b16 %v407
        %v884 = vunpack.c.l.b16 %v408
        %v885 = vunpack.c.h.b16 %v408
        %v886 = vunpack.c.l.b16 %v409
        %v887 = vunpack.c.h.b16 %v409
        %v888 = vunpack.c.l.b16 %v410
        %v889 = vunpack.c.h.b16 %v410
        %v890 = vunpack.c.l.b16 %v411
        %v891 = vunpack.c.h.b16 %v411
        %v892 = vunpack.c.l.b16 %v412
        %v893 = vunpack.c.h.b16 %v412
        %v894 = vunpack.c.l.b16 %v413
        %v895 = vunpack.c.h.b16 %v413
        %v896 = vunpack.c.l.b16 %v414
        %v897 = vunpack.c.h.b16 %v414
        %v898 = vunpack.c.l.b16 %v415
        %v899 = vunpack.c.h.b16 %v415
        %v900 = vunpack.c.l.b16 %v416
        %v901 = vunpack.c.h.b16 %v416
        %v902 = vunpack.c.l.b16 %v417
        %v903 = vunpack.c.h.b16 %v417
        %v904 = vunpack.c.l.b16 %v418
        %v905 = vunpack.c.h.b16 %v418
        %v906 = vunpack.c.l.b16 %v419
        %v907 = vunpack.c.h.b16 %v419
        %v908 = vunpack.c.l.b16 %v420
        %v909 = vunpack.c.h.b16 %v420
        %v910 = vunpack.c.l.b16 %v421
        %v911 = vunpack.c.h.b16 %v421
        %v912 = vunpack.c.l.b16 %v422
        %v913 = vunpack.c.h.b16 %v422
        %v914 = vunpack.c.l.b16 %v423
        %v915 = vunpack.c.h.b16 %v423
        %v916 = vunpack.c.l.b16 %v424
        %v917 = vunpack.c.h.b16 %v424
        %v918 = vunpack.c.l.b16 %v425
        %v919 = vunpack.c.h.b16 %v425
        %v920 = vunpack.c.l.b16 %v426
        %v921 = vunpack.c.h.b16 %v426
        %v922 = vunpack.c.l.b16 %v427
        %v923 = vunpack.c.h.b16 %v427
        %v924 = vunpack.c.l.b16 %v428
        %v925 = vunpack.c.h.b16 %v428
        %v926 = vunpack.c.l.b16 %v429
        %v927 = vunpack.c.h.b16 %v429
        %v928 = vunpack.c.l.b16 %v430
        %v929 = vunpack.c.h.b16 %v430
        %v930 = vunpack.c.l.b16 %v431
        %v931 = vunpack.c.h.b16 %v431
        %v932 = vunpack.c.l.b16 %v432
        %v933 = vunpack.c.h.b16 %v432
        %v934 = vunpack.c.l.b16 %v433
        %v935 = vunpack.c.h.b16 %v433
        %v936 = vunpack.c.l.b16 %v434
        %v937 = vunpack.c.h.b16 %v434
        %v938 = vunpack.c.l.b16 %v435
        %v939 = vunpack.c.h.b16 %v435
        %v940 = vunpack.c.l.b16 %v436
        %v941 = vunpack.c.h.b16 %v436
        %v942 = vunpack.c.l.b16 %v437
        %v943 = vunpack.c.h.b16 %v437
        %v944 = vunpack.c.l.b16 %v438
        %v945 = vunpack.c.h.b16 %v438
        %v946 = vunpack.c.l.b16 %v439
        %v947 = vunpack.c.h.b16 %v439
        %v948 = vunpack.c.l.b16 %v440
        %v949 = vunpack.c.h.b16 %v440
        %v950 = vunpack.c.l.b16 %v441
        %v951 = vunpack.c.h.b16 %v441
        %v952 = vunpack.c.l.b16 %v442
        %v953 = vunpack.c.h.b16 %v442
        %v954 = vunpack.c.l.b16 %v443
        %v955 = vunpack.c.h.b16 %v443
        %v956 = vunpack.c.l.b16 %v444
        %v957 = vunpack.c.h.b16 %v444
        %v958 = vunpack.c.l.b16 %v445
        %v959 = vunpack.c.h.b16 %v445
        %v960 = vunpack.c.l.b16 %v446
        %v961 = vunpack.c.h.b16 %v446
        %v962 = vunpack.c.l.b16 %v447
        %v963 = vunpack.c.h.b16 %v447
        %v964 = vunpack.c.l.b16 %v448
        %v965 = vunpack.c.h.b16 %v448
        %v966 = vunpack.c.l.b16 %v449
        %v967 = vunpack.c.h.b16 %v449
        %v968 = vunpack.c.l.b16 %v450
        %v969 = vunpack.c.h.b16 %v450
        %v970 = vunpack.c.l.b16 %v451
        %v971 = vunpack.c.h.b16 %v451
        %v972 = vunpack.c.l.b16 %v452
        %v973 = vunpack.c.h.b16 %v452
        %v974 = vunpack.c.l.b16 %v453
        %v975 = vunpack.c.h.b16 %v453
        %v976 = vunpack.c.l.b16 %v454
        %v977 = vunpack.c.h.b16 %v454
        %v978 = vunpack.c.l.b16 %v455
        %v979 = vunpack.c.h.b16 %v455
        %v980 = vunpack.c.l.b16 %v456
        %v981 = vunpack.c.h.b16 %v456
        %v982 = vunpack.c.l.b16 %v457
        %v983 = vunpack.c.h.b16 %v457
        %v984 = vunpack.c.l.b16 %v458
        %v985 = vunpack.c.h.b16 %v458
        %v986 = vunpack.c.l.b16 %v459
        %v987 = vunpack.c.h.b16 %v459
        %v988 = vunpack.c.l.b16 %v460
        %v989 = vunpack.c.h.b16 %v460
        %v990 = vunpack.c.l.b16 %v461
        %v991 = vunpack.c.h.b16 %v461
        %v992 = vunpack.c.l.b16 %v462
        %v993 = vunpack.c.h.b16 %v462
        %v994 = vunpack.c.l.b16 %v463
        %v995 = vunpack.c.h.b16 %v463
        %v996 = vunpack.c.l.b16 %v464
        %v997 = vunpack.c.h.b16 %v464
        %v998 = vunpack.c.l.b16 %v465
        %v999 = vunpack.c.h.b16 %v465
        %v1000 = vunpack.c.l.b16 %v466
        %v1001 = vunpack.c.h.b16 %v466
        %v1002 = vunpack.c.l.b16 %v467
        %v1003 = vunpack.c.h.b16 %v467
        %v1004 = vunpack.c.l.b16 %v468
        %v1005 = vunpack.c.h.b16 %v468
        %v1006 = vunpack.c.l.b16 %v469
        %v1007 = vunpack.c.h.b16 %v469
        %v1008 = vunpack.c.l.b16 %v470
        %v1009 = vunpack.c.h.b16 %v470
        %v1010 = vunpack.c.l.b16 %v471
        %v1011 = vunpack.c.h.b16 %v471
        %v1012 = vunpack.c.l.b16 %v472
        %v1013 = vunpack.c.h.b16 %v472
        %v1014 = vunpack.c.l.b16 %v473
        %v1015 = vunpack.c.h.b16 %v473
        %v1016 = vunpack.c.l.b16 %v474
        %v1017 = vunpack.c.h.b16 %v474
        %v1018 = vunpack.c.l.b16 %v475
        %v1019 = vunpack.c.h.b16 %v475
        %v1020 = vunpack.c.l.b16 %v476
        %v1021 = vunpack.c.h.b16 %v476
        %v1022 = vunpack.c.l.b16 %v477
        %v1023 = vunpack.c.h.b16 %v477
        %v1024 = vunpack.c.l.b16 %v478
        %v1025 = vunpack.c.h.b16 %v478
        %v1026 = vunpack.c.l.b16 %v479
        %v1027 = vunpack.c.h.b16 %v479
        %v1028 = vunpack.c.l.b16 %v480
        %v1029 = vunpack.c.h.b16 %v480
        %v1030 = vunpack.c.l.b16 %v481
        %v1031 = vunpack.c.h.b16 %v481
        %v1032 = vunpack.c.l.b16 %v482
        %v1033 = vunpack.c.h.b16 %v482
        %v1034 = vunpack.c.l.b16 %v483
        %v1035 = vunpack.c.h.b16 %v483
        %v1036 = vunpack.c.l.b16 %v484
        %v1037 = vunpack.c.h.b16 %v484
        %v1038 = vunpack.c.l.b16 %v485
        %v1039 = vunpack.c.h.b16 %v485
        %v1040 = vunpack.c.l.b16 %v486
        %v1041 = vunpack.c.h.b16 %v486
        %v1042 = vunpack.c.l.b16 %v487
        %v1043 = vunpack.c.h.b16 %v487
        %v1044 = vunpack.c.l.b16 %v488
        %v1045 = vunpack.c.h.b16 %v488
        %v1046 = vunpack.c.l.b16 %v489
        %v1047 = vunpack.c.h.b16 %v489
        %v1048 = vunpack.c.l.b16 %v490
        %v1049 = vunpack.c.h.b16 %v490
        %v1050 = vunpack.c.l.b16 %v491
        %v1051 = vunpack.c.h.b16 %v491
        %v1052 = vunpack.c.l.b16 %v492
        %v1053 = vunpack.c.h.b16 %v492
        %v1054 = vunpack.c.l.b16 %v493
        %v1055 = vunpack.c.h.b16 %v493
        %v1056 = vunpack.c.l.b16 %v494
        %v1057 = vunpack.c.h.b16 %v494
        %v1058 = vunpack.c.l.b16 %v495
        %v1059 = vunpack.c.h.b16 %v495
        %v1060 = vunpack.c.l.b16 %v496
        %v1061 = vunpack.c.h.b16 %v496
        %v1062 = vunpack.c.l.b16 %v497
        %v1063 = vunpack.c.h.b16 %v497
        %v1064 = vunpack.c.l.b16 %v498
        %v1065 = vunpack.c.h.b16 %v498
        %v1066 = vunpack.c.l.b16 %v499
        %v1067 = vunpack.c.h.b16 %v499
        %v1068 = vpack.c.b16 %v876, %v860
        %v1069 = vpack.c.b16 %v877, %v861
        %v1070 = vpack.c.b16 %v878, %v862
        %v1071 = vpack.c.b16 %v879, %v863
        %v1072 = vpack.c.b16 %v880, %v864
        %v1073 = vpack.c.b16 %v881, %v865
        %v1074 = vpack.c.b16 %v882, %v866
        %v1075 = vpack.c.b16 %v883, %v867
        %v1076 = vpack.c.b16 %v884, %v868
        %v1077 = vpack.c.b16 %v885, %v869
        %v1078 = vpack.c.b16 %v886, %v870
        %v1079 = vpack.c.b16 %v887, %v871
        %v1080 = vpack.c.b16 %v888, %v872
        %v1081 = vpack.c.b16 %v889, %v873
        %v1082 = vpack.c.b16 %v890, %v874
        %v1083 = vpack.c.b16 %v891, %v875
        %v1084 = vpack.c.b16 %v908, %v892
        %v1085 = vpack.c.b16 %v909, %v893
        %v1086 = vpack.c.b16 %v910, %v894
        %v1087 = vpack.c.b16 %v911, %v895
        %v1088 = vpack.c.b16 %v912, %v896
        %v1089 = vpack.c.b16 %v913, %v897
        %v1090 = vpack.c.b16 %v914, %v898
        %v1091 = vpack.c.b16 %v915, %v899
        %v1092 = vpack.c.b16 %v916, %v900
        %v1093 = vpack.c.b16 %v917, %v901
        %v1094 = vpack.c.b16 %v918, %v902
        %v1095 = vpack.c.b16 %v919, %v903
        %v1096 = vpack.c.b16 %v920, %v904
        %v1097 = vpack.c.b16 %v921, %v905
        %v1098 = vpack.c.b16 %v922, %v906
        %v1099 = vpack.c.b16 %v923, %v907
        %v1100 = vpack.c.b16 %v940, %v924
        %v1101 = vpack.c.b16 %v941, %v925
        %v1102 = vpack.c.b16 %v942, %v926
        %v1103 = vpack.c.b16 %v943, %v927
        %v1104 = vpack.c.b16 %v944, %v928
        %v1105 = vpack.c.b16 %v945, %v929
        %v1106 = vpack.c.b16 %v946, %v930
        %v1107 = vpack.c.b16 %v947, %v931
        %v1108 = vpack.c.b16 %v948, %v932
        %v1109 = vpack.c.b16 %v949, %v933
        %v1110 = vpack.c.b16 %v950, %v934
        %v1111 = vpack.c.b16 %v951, %v935
        %v1112 = vpack.c.b16 %v952, %v936
        %v1113 = vpack.c.b16 %v953, %v937
        %v1114 = vpack.c.b16 %v954, %v938
        %v1115 = vpack.c.b16 %v955, %v939
        %v1116 = vpack.c.b16 %v972, %v956
        %v1117 = vpack.c.b16 %v973, %v957
        %v1118 = vpack.c.b16 %v974, %v958
        %v1119 = vpack.c.b16 %v975, %v959
        %v1120 = vpack.c.b16 %v976, %v960
        %v1121 = vpack.c.b16 %v977, %v961
        %v1122 = vpack.c.b16 %v978, %v962
        %v1123 = vpack.c.b16 %v979, %v963
        %v1124 = vpack.c.b16 %v980, %v964
        %v1125 = vpack.c.b16 %v981, %v965
        %v1126 = vpack.c.b16 %v982, %v966
        %v1127 = vpack.c.b16 %v983, %v967
        %v1128 = vpack.c.b16 %v984, %v968
        %v1129 = vpack.c.b16 %v985, %v969
        %v1130 = vpack.c.b16 %v986, %v970
        %v1131 = vpack.c.b16 %v987, %v971
        %v1132 = vpack.c.b16 %v1004, %v988
        %v1133 = vpack.c.b16 %v1005, %v989
        %v1134 = vpack.c.b16 %v1006, %v990
        %v1135 = vpack.c.b16 %v1007, %v991
        %v1136 = vpack.c.b16 %v1008, %v992
        %v1137 = vpack.c.b16 %v1009, %v993
        %v1138 = vpack.c.b16 %v1010, %v994
        %v1139 = vpack.c.b16 %v1011, %v995
        %v1140 = vpack.c.b16 %v1012, %v996
        %v1141 = vpack.c.b16 %v1013, %v997
        %v1142 = vpack.c.b16 %v1014, %v998
        %v1143 = vpack.c.b16 %v1015, %v999
        %v1144 = vpack.c.b16 %v1016, %v1000
        %v1145 = vpack.c.b16 %v1017, %v1001
        %v1146 = vpack.c.b16 %v1018, %v1002
        %v1147 = vpack.c.b16 %v1019, %v1003
        %v1148 = vpack.c.b16 %v1036, %v1020
        %v1149 = vpack.c.b16 %v1037, %v1021
        %v1150 = vpack.c.b16 %v1038, %v1022
        %v1151 = vpack.c.b16 %v1039, %v1023
        %v1152 = vpack.c.b16 %v1040, %v1024
        %v1153 = vpack.c.b16 %v1041, %v1025
        %v1154 = vpack.c.b16 %v1042, %v1026
        %v1155 = vpack.c.b16 %v1043, %v1027
        %v1156 = vpack.c.b16 %v1044, %v1028
        %v1157 = vpack.c.b16 %v1045, %v1029
        %v1158 = vpack.c.b16 %v1046, %v1030
        %v1159 = vpack.c.b16 %v1047, %v1031
        %v1160 = vpack.c.b16 %v1048, %v1032
        %v1161 = vpack.c.b16 %v1049, %v1033
        %v1162 = vpack.c.b16 %v1050, %v1034
        %v1163 = vpack.c.b16 %v1051, %v1035
        %v1164 = vpack.c.b16 %v1052, %v1052
        %v1165 = vpack.c.b16 %v1053, %v1053
        %v1166 = vpack.c.b16 %v1054, %v1054
        %v1167 = vpack.c.b16 %v1055, %v1055
        %v1168 = vpack.c.b16 %v1056, %v1056
        %v1169 = vpack.c.b16 %v1057, %v1057
        %v1170 = vpack.c.b16 %v1058, %v1058
        %v1171 = vpack.c.b16 %v1059, %v1059
        %v1172 = vpack.c.b16 %v1060, %v1060
        %v1173 = vpack.c.b16 %v1061, %v1061
        %v1174 = vpack.c.b16 %v1062, %v1062
        %v1175 = vpack.c.b16 %v1063, %v1063
        %v1176 = vpack.c.b16 %v1064, %v1064
        %v1177 = vpack.c.b16 %v1065, %v1065
        %v1178 = vpack.c.b16 %v1066, %v1066
        %v1179 = vpack.c.b16 %v1067, %v1067
        %v1548 = vunpack.c.l.b16 %v500
        %v1549 = vunpack.c.l.b16 %v501
        %v1550 = vunpack.c.l.b16 %v502
        %v1551 = vunpack.c.l.b16 %v503
        %v1552 = vunpack.c.l.b16 %v504
        %v1553 = vunpack.c.l.b16 %v505
        %v1554 = vunpack.c.l.b16 %v506
        %v1555 = vunpack.c.l.b16 %v507
        %v1556 = vunpack.c.l.b16 %v508
        %v1557 = vunpack.c.l.b16 %v509
        %v1558 = vunpack.c.l.b16 %v510
        %v1559 = vunpack.c.l.b16 %v511
        %v1560 = vunpack.c.l.b16 %v512
        %v1561 = vunpack.c.l.b16 %v513
        %v1562 = vunpack.c.l.b16 %v514
        %v1563 = vunpack.c.l.b16 %v515
        %v1564 = vunpack.c.l.b16 %v516
        %v1565 = vunpack.c.l.b16 %v517
        %v1566 = vunpack.c.l.b16 %v518
        %v1567 = vunpack.c.l.b16 %v519
        %v1568 = vunpack.c.l.b16 %v520
        %v1569 = vunpack.c.l.b16 %v521
        %v1570 = vunpack.c.l.b16 %v522
        %v1571 = vunpack.c.l.b16 %v523
        %v1572 = vunpack.c.l.b16 %v524
        %v1573 = vunpack.c.l.b16 %v525
        %v1574 = vunpack.c.l.b16 %v526
        %v1575 = vunpack.c.l.b16 %v527
        %v1576 = vunpack.c.l.b16 %v528
        %v1577 = vunpack.c.l.b16 %v529
        %v1578 = vunpack.c.l.b16 %v530
        %v1579 = vunpack.c.l.b16 %v531
        %v1580 = vunpack.c.l.b16 %v532
        %v1581 = vunpack.c.l.b16 %v533
        %v1582 = vunpack.c.l.b16 %v534
        %v1583 = vunpack.c.l.b16 %v535
        %v1584 = vunpack.c.l.b16 %v536
        %v1585 = vunpack.c.l.b16 %v537
        %v1586 = vunpack.c.l.b16 %v538
        %v1587 = vunpack.c.l.b16 %v539
        %v1588 = vunpack.c.l.b16 %v540
        %v1589 = vunpack.c.l.b16 %v541
        %v1590 = vunpack.c.l.b16 %v542
        %v1591 = vunpack.c.l.b16 %v543
        %v1592 = vunpack.c.l.b16 %v544
        %v1593 = vunpack.c.l.b16 %v545
        %v1594 = vunpack.c.l.b16 %v546
        %v1595 = vunpack.c.l.b16 %v547
        %v1596 = vunpack.c.l.b16 %v548
        %v1597 = vunpack.c.l.b16 %v549
        %v1598 = vunpack.c.l.b16 %v550
        %v1599 = vunpack.c.l.b16 %v551
        %v1600 = vunpack.c.l.b16 %v552
        %v1601 = vunpack.c.l.b16 %v553
        %v1602 = vunpack.c.l.b16 %v554
        %v1603 = vunpack.c.l.b16 %v555
        %v1604 = vunpack.c.l.b16 %v556
        %v1605 = vunpack.c.l.b16 %v557
        %v1606 = vunpack.c.l.b16 %v558
        %v1607 = vunpack.c.l.b16 %v559
        %v1608 = vunpack.c.l.b16 %v560
        %v1609 = vunpack.c.l.b16 %v561
        %v1610 = vunpack.c.l.b16 %v562
        %v1611 = vunpack.c.l.b16 %v563
        %v1612 = vunpack.c.l.b16 %v564
        %v1613 = vunpack.c.l.b16 %v565
        %v1614 = vunpack.c.l.b16 %v566
        %v1615 = vunpack.c.l.b16 %v567
        %v1616 = vunpack.c.l.b16 %v568
        %v1617 = vunpack.c.l.b16 %v569
        %v1618 = vunpack.c.l.b16 %v570
        %v1619 = vunpack.c.l.b16 %v571
        %v1620 = vunpack.c.l.b16 %v572
        %v1621 = vunpack.c.l.b16 %v573
        %v1622 = vunpack.c.l.b16 %v574
        %v1623 = vunpack.c.l.b16 %v575
        %v1624 = vunpack.c.l.b16 %v576
        %v1625 = vunpack.c.l.b16 %v577
        %v1626 = vunpack.c.l.b16 %v578
        %v1627 = vunpack.c.l.b16 %v579
        %v1628 = vunpack.c.l.b16 %v580
        %v1629 = vunpack.c.l.b16 %v581
        %v1630 = vunpack.c.l.b16 %v582
        %v1631 = vunpack.c.l.b16 %v583
        %v1632 = vunpack.c.l.b16 %v584
        %v1633 = vunpack.c.l.b16 %v585
        %v1634 = vunpack.c.l.b16 %v586
        %v1635 = vunpack.c.l.b16 %v587
        %v1636 = vunpack.c.l.b16 %v588
        %v1637 = vunpack.c.l.b16 %v589
        %v1638 = vunpack.c.l.b16 %v590
        %v1639 = vunpack.c.l.b16 %v591
        %v1640 = vunpack.c.l.b16 %v592
        %v1641 = vunpack.c.l.b16 %v593
        %v1642 = vunpack.c.l.b16 %v594
        %v1643 = vunpack.c.l.b16 %v595
        %v1644 = vunpack.c.l.b16 %v596
        %v1645 = vunpack.c.l.b16 %v597
        %v1646 = vunpack.c.l.b16 %v598
        %v1647 = vunpack.c.l.b16 %v599
        %v1648 = vunpack.c.l.b16 %v600
        %v1649 = vunpack.c.l.b16 %v601
        %v1650 = vunpack.c.l.b16 %v602
        %v1651 = vunpack.c.l.b16 %v603
        %v1652 = vunpack.c.l.b16 %v604
        %v1653 = vunpack.c.l.b16 %v605
        %v1654 = vunpack.c.l.b16 %v606
        %v1655 = vunpack.c.l.b16 %v607
        %v1656 = vunpack.c.l.b16 %v608
        %v1657 = vunpack.c.l.b16 %v609
        %v1658 = vunpack.c.l.b16 %v610
        %v1659 = vunpack.c.l.b16 %v611
        %v1660 = vunpack.c.l.b16 %v612
        %v1661 = vunpack.c.l.b16 %v613
        %v1662 = vunpack.c.l.b16 %v614
        %v1663 = vunpack.c.l.b16 %v615
        %v1664 = vunpack.c.l.b16 %v616
        %v1665 = vunpack.c.l.b16 %v617
        %v1666 = vunpack.c.l.b16 %v618
        %v1667 = vunpack.c.l.b16 %v619
        %v1668 = vunpack.c.l.b16 %v620
        %v1669 = vunpack.c.l.b16 %v621
        %v1670 = vunpack.c.l.b16 %v622
        %v1671 = vunpack.c.l.b16 %v623
        %v1672 = vunpack.c.l.b16 %v624
        %v1673 = vunpack.c.l.b16 %v625
        %v1674 = vunpack.c.l.b16 %v626
        %v1675 = vunpack.c.l.b16 %v627
        %v1676 = vunpack.c.l.b16 %v628
        %v1677 = vunpack.c.l.b16 %v629
        %v1678 = vunpack.c.l.b16 %v630
        %v1679 = vunpack.c.l.b16 %v631
        %v1680 = vunpack.c.l.b16 %v632
        %v1681 = vunpack.c.l.b16 %v633
        %v1682 = vunpack.c.l.b16 %v634
        %v1683 = vunpack.c.l.b16 %v635
        %v1684 = vunpack.c.l.b16 %v636
        %v1685 = vunpack.c.l.b16 %v637
        %v1686 = vunpack.c.l.b16 %v638
        %v1687 = vunpack.c.l.b16 %v639
        %v1688 = vunpack.c.l.b16 %v640
        %v1689 = vunpack.c.l.b16 %v641
        %v1690 = vunpack.c.l.b16 %v642
        %v1691 = vunpack.c.l.b16 %v643
        %v1692 = vunpack.c.l.b16 %v644
        %v1693 = vunpack.c.l.b16 %v645
        %v1694 = vunpack.c.l.b16 %v646
        %v1695 = vunpack.c.l.b16 %v647
        %v1696 = vunpack.c.l.b16 %v648
        %v1697 = vunpack.c.l.b16 %v649
        %v1698 = vunpack.c.l.b16 %v650
        %v1699 = vunpack.c.l.b16 %v651
        %v1700 = vunpack.c.l.b16 %v652
        %v1701 = vunpack.c.l.b16 %v653
        %v1702 = vunpack.c.l.b16 %v654
        %v1703 = vunpack.c.l.b16 %v655
        %v1704 = vunpack.c.l.b16 %v656
        %v1705 = vunpack.c.l.b16 %v657
        %v1706 = vunpack.c.l.b16 %v658
        %v1707 = vunpack.c.l.b16 %v659
        %v1708 = vunpack.c.l.b16 %v660
        %v1709 = vunpack.c.l.b16 %v661
        %v1710 = vunpack.c.l.b16 %v662
        %v1711 = vunpack.c.l.b16 %v663
        %v1712 = vunpack.c.l.b16 %v664
        %v1713 = vunpack.c.l.b16 %v665
        %v1714 = vunpack.c.l.b16 %v666
        %v1715 = vunpack.c.l.b16 %v667
        %v1716 = vunpack.c.l.b16 %v668
        %v1717 = vunpack.c.l.b16 %v669
        %v1718 = vunpack.c.l.b16 %v670
        %v1719 = vunpack.c.l.b16 %v671
        %v1720 = vunpack.c.l.b16 %v672
        %v1721 = vunpack.c.l.b16 %v673
        %v1722 = vunpack.c.l.b16 %v674
        %v1723 = vunpack.c.l.b16 %v675
        %v1724 = vunpack.c.l.b16 %v676
        %v1725 = vunpack.c.l.b16 %v677
        %v1726 = vunpack.c.l.b16 %v678
        %v1727 = vunpack.c.l.b16 %v679
        %v1728 = vunpack.c.l.b16 %v680
        %v1729 = vunpack.c.l.b16 %v681
        %v1730 = vunpack.c.l.b16 %v682
        %v1731 = vunpack.c.l.b16 %v683
        %v1732 = vunpack.c.l.b16 %v684
        %v1733 = vunpack.c.l.b16 %v685
        %v1734 = vunpack.c.l.b16 %v686
        %v1735 = vunpack.c.l.b16 %v687
        %v1736 = vunpack.c.l.b16 %v688
        %v1737 = vunpack.c.l.b16 %v689
        %v1738 = vunpack.c.l.b16 %v690
        %v1739 = vunpack.c.l.b16 %v691
        %v1740 = vunpack.c.l.b16 %v692
        %v1741 = vunpack.c.l.b16 %v693
        %v1742 = vunpack.c.l.b16 %v694
        %v1743 = vunpack.c.l.b16 %v695
        %v1744 = vunpack.c.l.b16 %v696
        %v1745 = vunpack.c.l.b16 %v697
        %v1746 = vunpack.c.l.b16 %v698
        %v1747 = vunpack.c.l.b16 %v699
        %v1748 = vunpack.c.l.b16 %v700
        %v1749 = vunpack.c.l.b16 %v701
        %v1750 = vunpack.c.l.b16 %v702
        %v1751 = vunpack.c.l.b16 %v703
        %v1752 = vunpack.c.l.b16 %v704
        %v1753 = vunpack.c.l.b16 %v705
        %v1754 = vunpack.c.l.b16 %v706
        %v1755 = vunpack.c.l.b16 %v707
        %v1756 = vunpack.c.l.b16 %v708
        %v1757 = vunpack.c.l.b16 %v709
        %v1758 = vunpack.c.l.b16 %v710
        %v1759 = vunpack.c.l.b16 %v711
        %v1760 = vunpack.c.l.b16 %v712
        %v1761 = vunpack.c.l.b16 %v713
        %v1762 = vunpack.c.l.b16 %v714
        %v1763 = vunpack.c.l.b16 %v715
        %v1764 = vunpack.c.l.b16 %v716
        %v1765 = vunpack.c.l.b16 %v717
        %v1766 = vunpack.c.l.b16 %v718
        %v1767 = vunpack.c.l.b16 %v719
        %v1768 = vunpack.c.l.b16 %v720
        %v1769 = vunpack.c.l.b16 %v721
        %v1770 = vunpack.c.l.b16 %v722
        %v1771 = vunpack.c.l.b16 %v723
        %v1772 = vunpack.c.l.b16 %v724
        %v1773 = vunpack.c.l.b16 %v725
        %v1774 = vunpack.c.l.b16 %v726
        %v1775 = vunpack.c.l.b16 %v727
        %v1776 = vunpack.c.l.b16 %v728
        %v1777 = vunpack.c.l.b16 %v729
        %v1778 = vunpack.c.l.b16 %v730
        %v1779 = vunpack.c.l.b16 %v731
        %v1780 = vunpack.c.l.b16 %v732
        %v1781 = vunpack.c.l.b16 %v733
        %v1782 = vunpack.c.l.b16 %v734
        %v1783 = vunpack.c.l.b16 %v735
        %v1784 = vunpack.c.l.b16 %v736
        %v1785 = vunpack.c.l.b16 %v737
        %v1786 = vunpack.c.l.b16 %v738
        %v1787 = vunpack.c.l.b16 %v739
        %v1788 = vunpack.c.l.b16 %v740
        %v1789 = vunpack.c.l.b16 %v741
        %v1790 = vunpack.c.l.b16 %v742
        %v1791 = vunpack.c.l.b16 %v743
        %v1792 = vunpack.c.l.b16 %v744
        %v1793 = vunpack.c.l.b16 %v745
        %v1794 = vunpack.c.l.b16 %v746
        %v1795 = vunpack.c.l.b16 %v747
        %v1796 = vunpack.c.l.b16 %v748
        %v1797 = vunpack.c.l.b16 %v749
        %v1798 = vunpack.c.l.b16 %v750
        %v1799 = vunpack.c.l.b16 %v751
        %v1800 = vunpack.c.l.b16 %v752
        %v1801 = vunpack.c.l.b16 %v753
        %v1802 = vunpack.c.l.b16 %v754
        %v1803 = vunpack.c.l.b16 %v755
        %v1804 = vpack.c.b16 %v1549, %v1548
        %v1805 = vpack.c.b16 %v1551, %v1550
        %v1806 = vpack.c.b16 %v1553, %v1552
        %v1807 = vpack.c.b16 %v1555, %v1554
        %v1808 = vpack.c.b16 %v1557, %v1556
        %v1809 = vpack.c.b16 %v1559, %v1558
        %v1810 = vpack.c.b16 %v1561, %v1560
        %v1811 = vpack.c.b16 %v1563, %v1562
        %v1812 = vpack.c.b16 %v1565, %v1564
        %v1813 = vpack.c.b16 %v1567, %v1566
        %v1814 = vpack.c.b16 %v1569, %v1568
        %v1815 = vpack.c.b16 %v1571, %v1570
        %v1816 = vpack.c.b16 %v1573, %v1572
        %v1817 = vpack.c.b16 %v1575, %v1574
        %v1818 = vpack.c.b16 %v1577, %v1576
        %v1819 = vpack.c.b16 %v1579, %v1578
        %v1820 = vpack.c.b16 %v1581, %v1580
        %v1821 = vpack.c.b16 %v1583, %v1582
        %v1822 = vpack.c.b16 %v1585, %v1584
        %v1823 = vpack.c.b16 %v1587, %v1586
        %v1824 = vpack.c.b16 %v1589, %v1588
        %v1825 = vpack.c.b16 %v1591, %v1590
        %v1826 = vpack.c.b16 %v1593, %v1592
        %v1827 = vpack.c.b16 %v1595, %v1594
        %v1828 = vpack.c.b16 %v1597, %v1596
        %v1829 = vpack.c.b16 %v1599, %v1598
        %v1830 = vpack.c.b16 %v1601, %v1600
        %v1831 = vpack.c.b16 %v1603, %v1602
        %v1832 = vpack.c.b16 %v1605, %v1604
        %v1833 = vpack.c.b16 %v1607, %v1606
        %v1834 = vpack.c.b16 %v1609, %v1608
        %v1835 = vpack.c.b16 %v1611, %v1610
        %v1836 = vpack.c.b16 %v1613, %v1612
        %v1837 = vpack.c.b16 %v1615, %v1614
        %v1838 = vpack.c.b16 %v1617, %v1616
        %v1839 = vpack.c.b16 %v1619, %v1618
        %v1840 = vpack.c.b16 %v1621, %v1620
        %v1841 = vpack.c.b16 %v1623, %v1622
        %v1842 = vpack.c.b16 %v1625, %v1624
        %v1843 = vpack.c.b16 %v1627, %v1626
        %v1844 = vpack.c.b16 %v1629, %v1628
        %v1845 = vpack.c.b16 %v1631, %v1630
        %v1846 = vpack.c.b16 %v1633, %v1632
        %v1847 = vpack.c.b16 %v1635, %v1634
        %v1848 = vpack.c.b16 %v1637, %v1636
        %v1849 = vpack.c.b16 %v1639, %v1638
        %v1850 = vpack.c.b16 %v1641, %v1640
        %v1851 = vpack.c.b16 %v1643, %v1642
        %v1852 = vpack.c.b16 %v1645, %v1644
        %v1853 = vpack.c.b16 %v1647, %v1646
        %v1854 = vpack.c.b16 %v1649, %v1648
        %v1855 = vpack.c.b16 %v1651, %v1650
        %v1856 = vpack.c.b16 %v1653, %v1652
        %v1857 = vpack.c.b16 %v1655, %v1654
        %v1858 = vpack.c.b16 %v1657, %v1656
        %v1859 = vpack.c.b16 %v1659, %v1658
        %v1860 = vpack.c.b16 %v1661, %v1660
        %v1861 = vpack.c.b16 %v1663, %v1662
        %v1862 = vpack.c.b16 %v1665, %v1664
        %v1863 = vpack.c.b16 %v1667, %v1666
        %v1864 = vpack.c.b16 %v1669, %v1668
        %v1865 = vpack.c.b16 %v1671, %v1670
        %v1866 = vpack.c.b16 %v1673, %v1672
        %v1867 = vpack.c.b16 %v1675, %v1674
        %v1868 = vpack.c.b16 %v1677, %v1676
        %v1869 = vpack.c.b16 %v1679, %v1678
        %v1870 = vpack.c.b16 %v1681, %v1680
        %v1871 = vpack.c.b16 %v1683, %v1682
        %v1872 = vpack.c.b16 %v1685, %v1684
        %v1873 = vpack.c.b16 %v1687, %v1686
        %v1874 = vpack.c.b16 %v1689, %v1688
        %v1875 = vpack.c.b16 %v1691, %v1690
        %v1876 = vpack.c.b16 %v1693, %v1692
        %v1877 = vpack.c.b16 %v1695, %v1694
        %v1878 = vpack.c.b16 %v1697, %v1696
        %v1879 = vpack.c.b16 %v1699, %v1698
        %v1880 = vpack.c.b16 %v1701, %v1700
        %v1881 = vpack.c.b16 %v1703, %v1702
        %v1882 = vpack.c.b16 %v1705, %v1704
        %v1883 = vpack.c.b16 %v1707, %v1706
        %v1884 = vpack.c.b16 %v1709, %v1708
        %v1885 = vpack.c.b16 %v1711, %v1710
        %v1886 = vpack.c.b16 %v1713, %v1712
        %v1887 = vpack.c.b16 %v1715, %v1714
        %v1888 = vpack.c.b16 %v1717, %v1716
        %v1889 = vpack.c.b16 %v1719, %v1718
        %v1890 = vpack.c.b16 %v1721, %v1720
        %v1891 = vpack.c.b16 %v1723, %v1722
        %v1892 = vpack.c.b16 %v1725, %v1724
        %v1893 = vpack.c.b16 %v1727, %v1726
        %v1894 = vpack.c.b16 %v1729, %v1728
        %v1895 = vpack.c.b16 %v1731, %v1730
        %v1896 = vpack.c.b16 %v1733, %v1732
        %v1897 = vpack.c.b16 %v1735, %v1734
        %v1898 = vpack.c.b16 %v1737, %v1736
        %v1899 = vpack.c.b16 %v1739, %v1738
        %v1900 = vpack.c.b16 %v1741, %v1740
        %v1901 = vpack.c.b16 %v1743, %v1742
        %v1902 = vpack.c.b16 %v1745, %v1744
        %v1903 = vpack.c.b16 %v1747, %v1746
        %v1904 = vpack.c.b16 %v1749, %v1748
        %v1905 = vpack.c.b16 %v1751, %v1750
        %v1906 = vpack.c.b16 %v1753, %v1752
        %v1907 = vpack.c.b16 %v1755, %v1754
        %v1908 = vpack.c.b16 %v1757, %v1756
        %v1909 = vpack.c.b16 %v1759, %v1758
        %v1910 = vpack.c.b16 %v1761, %v1760
        %v1911 = vpack.c.b16 %v1763, %v1762
        %v1912 = vpack.c.b16 %v1765, %v1764
        %v1913 = vpack.c.b16 %v1767, %v1766
        %v1914 = vpack.c.b16 %v1769, %v1768
        %v1915 = vpack.c.b16 %v1771, %v1770
        %v1916 = vpack.c.b16 %v1773, %v1772
        %v1917 = vpack.c.b16 %v1775, %v1774
        %v1918 = vpack.c.b16 %v1777, %v1776
        %v1919 = vpack.c.b16 %v1779, %v1778
        %v1920 = vpack.c.b16 %v1781, %v1780
        %v1921 = vpack.c.b16 %v1783, %v1782
        %v1922 = vpack.c.b16 %v1785, %v1784
        %v1923 = vpack.c.b16 %v1787, %v1786
        %v1924 = vpack.c.b16 %v1789, %v1788
        %v1925 = vpack.c.b16 %v1791, %v1790
        %v1926 = vpack.c.b16 %v1793, %v1792
        %v1927 = vpack.c.b16 %v1795, %v1794
        %v1928 = vpack.c.b16 %v1797, %v1796
        %v1929 = vpack.c.b16 %v1799, %v1798
        %v1930 = vpack.c.b16 %v1801, %v1800
        %v1931 = vpack.c.b16 %v1803, %v1802
        %2060 = vmatpush.bf16.msra.mxu0 %v1811
        %2061 = vmatpush.bf16.msra.mxu0 %v1810
        %2062 = vmatpush.bf16.msra.mxu0 %v1809
        %2063 = vmatpush.bf16.msra.mxu0 %v1808
        %2064 = vmatpush.bf16.msra.mxu0 %v1807
        %2065 = vmatpush.bf16.msra.mxu0 %v1806
        %2066 = vmatpush.bf16.msra.mxu0 %v1805
        %2067 = vmatpush.bf16.msra.mxu0 %v1804
        %2068 = vmatmul.bf16.gmra.mxu0 %v1068
        %v2069 = vpop.f32.mrf.mxu0
        %v2070 = vadd.f32 0.0, %v2069
        %v2071 = vpop.f32.mrf.mxu0
        %v2072 = vadd.f32 0.0, %v2071
        %2073 = vmatmul.bf16.gmra.mxu0 %v1084
        %v2074 = vpop.f32.mrf.mxu0
        %v2075 = vadd.f32 0.0, %v2074
        %v2076 = vpop.f32.mrf.mxu0
        %v2077 = vadd.f32 0.0, %v2076
        %2078 = vmatmul.bf16.gmra.mxu0 %v1100
        %v2079 = vpop.f32.mrf.mxu0
        %v2080 = vadd.f32 0.0, %v2079
        %v2081 = vpop.f32.mrf.mxu0
        %v2082 = vadd.f32 0.0, %v2081
        %2083 = vmatmul.bf16.gmra.mxu0 %v1116
        %v2084 = vpop.f32.mrf.mxu0
        %v2085 = vadd.f32 0.0, %v2084
        %v2086 = vpop.f32.mrf.mxu0
        %v2087 = vadd.f32 0.0, %v2086
        %2088 = vmatmul.bf16.gmra.mxu0 %v1132
        %v2089 = vpop.f32.mrf.mxu0
        %v2090 = vadd.f32 0.0, %v2089
        %v2091 = vpop.f32.mrf.mxu0
        %v2092 = vadd.f32 0.0, %v2091
        %2093 = vmatmul.bf16.gmra.mxu0 %v1148
        %v2094 = vpop.f32.mrf.mxu0
        %v2095 = vadd.f32 0.0, %v2094
        %v2096 = vpop.f32.mrf.mxu0
        %v2097 = vadd.f32 0.0, %v2096
        %2098 = vmatmul.bf16.gmra.mxu0 %v1164
        %v2099 = vpop.f32.mrf.mxu0
        %v2100 = vadd.f32 0.0, %v2099
        %v2101 = vpop.f32.mrf.mxu0
        %2102 = vdwg.mxu0
        %2103 = vmatpush.bf16.msra.mxu0 %v1819
        %2104 = vmatpush.bf16.msra.mxu0 %v1818
        %2105 = vmatpush.bf16.msra.mxu0 %v1817
        %2106 = vmatpush.bf16.msra.mxu0 %v1816
        %2107 = vmatpush.bf16.msra.mxu0 %v1815
        %2108 = vmatpush.bf16.msra.mxu0 %v1814
        %2109 = vmatpush.bf16.msra.mxu0 %v1813
        %2110 = vmatpush.bf16.msra.mxu0 %v1812
        %2111 = vmatmul.bf16.gmra.mxu0 %v1069
        %v2112 = vpop.f32.mrf.mxu0
        %v2113 = vadd.f32 %v2070, %v2112
        %v2114 = vpop.f32.mrf.mxu0
        %v2115 = vadd.f32 %v2072, %v2114
        %2116 = vmatmul.bf16.gmra.mxu0 %v1085
        %v2117 = vpop.f32.mrf.mxu0
        %v2118 = vadd.f32 %v2075, %v2117
        %v2119 = vpop.f32.mrf.mxu0
        %v2120 = vadd.f32 %v2077, %v2119
        %2121 = vmatmul.bf16.gmra.mxu0 %v1101
        %v2122 = vpop.f32.mrf.mxu0
        %v2123 = vadd.f32 %v2080, %v2122
        %v2124 = vpop.f32.mrf.mxu0
        %v2125 = vadd.f32 %v2082, %v2124
        %2126 = vmatmul.bf16.gmra.mxu0 %v1117
        %v2127 = vpop.f32.mrf.mxu0
        %v2128 = vadd.f32 %v2085, %v2127
        %v2129 = vpop.f32.mrf.mxu0
        %v2130 = vadd.f32 %v2087, %v2129
        %2131 = vmatmul.bf16.gmra.mxu0 %v1133
        %v2132 = vpop.f32.mrf.mxu0
        %v2133 = vadd.f32 %v2090, %v2132
        %v2134 = vpop.f32.mrf.mxu0
        %v2135 = vadd.f32 %v2092, %v2134
        %2136 = vmatmul.bf16.gmra.mxu0 %v1149
        %v2137 = vpop.f32.mrf.mxu0
        %v2138 = vadd.f32 %v2095, %v2137
        %v2139 = vpop.f32.mrf.mxu0
        %v2140 = vadd.f32 %v2097, %v2139
        %2141 = vmatmul.bf16.gmra.mxu0 %v1165
        %v2142 = vpop.f32.mrf.mxu0
        %v2143 = vadd.f32 %v2100, %v2142
        %v2144 = vpop.f32.mrf.mxu0
        %2145 = vdwg.mxu0
        %2146 = vmatpush.bf16.msra.mxu0 %v1827
        %2147 = vmatpush.bf16.msra.mxu0 %v1826
        %2148 = vmatpush.bf16.msra.mxu0 %v1825
        %2149 = vmatpush.bf16.msra.mxu0 %v1824
        %2150 = vmatpush.bf16.msra.mxu0 %v1823
        %2151 = vmatpush.bf16.msra.mxu0 %v1822
        %2152 = vmatpush.bf16.msra.mxu0 %v1821
        %2153 = vmatpush.bf16.msra.mxu0 %v1820
        %2154 = vmatmul.bf16.gmra.mxu0 %v1070
        %v2155 = vpop.f32.mrf.mxu0
        %v2156 = vadd.f32 %v2113, %v2155
        %v2157 = vpop.f32.mrf.mxu0
        %v2158 = vadd.f32 %v2115, %v2157
        %2159 = vmatmul.bf16.gmra.mxu0 %v1086
        %v2160 = vpop.f32.mrf.mxu0
        %v2161 = vadd.f32 %v2118, %v2160
        %v2162 = vpop.f32.mrf.mxu0
        %v2163 = vadd.f32 %v2120, %v2162
        %2164 = vmatmul.bf16.gmra.mxu0 %v1102
        %v2165 = vpop.f32.mrf.mxu0
        %v2166 = vadd.f32 %v2123, %v2165
        %v2167 = vpop.f32.mrf.mxu0
        %v2168 = vadd.f32 %v2125, %v2167
        %2169 = vmatmul.bf16.gmra.mxu0 %v1118
        %v2170 = vpop.f32.mrf.mxu0
        %v2171 = vadd.f32 %v2128, %v2170
        %v2172 = vpop.f32.mrf.mxu0
        %v2173 = vadd.f32 %v2130, %v2172
        %2174 = vmatmul.bf16.gmra.mxu0 %v1134
        %v2175 = vpop.f32.mrf.mxu0
        %v2176 = vadd.f32 %v2133, %v2175
        %v2177 = vpop.f32.mrf.mxu0
        %v2178 = vadd.f32 %v2135, %v2177
        %2179 = vmatmul.bf16.gmra.mxu0 %v1150
        %v2180 = vpop.f32.mrf.mxu0
        %v2181 = vadd.f32 %v2138, %v2180
        %v2182 = vpop.f32.mrf.mxu0
        %v2183 = vadd.f32 %v2140, %v2182
        %2184 = vmatmul.bf16.gmra.mxu0 %v1166
        %v2185 = vpop.f32.mrf.mxu0
        %v2186 = vadd.f32 %v2143, %v2185
        %v2187 = vpop.f32.mrf.mxu0
        %2188 = vdwg.mxu0
        %2189 = vmatpush.bf16.msra.mxu0 %v1835
        %2190 = vmatpush.bf16.msra.mxu0 %v1834
        %2191 = vmatpush.bf16.msra.mxu0 %v1833
        %2192 = vmatpush.bf16.msra.mxu0 %v1832
        %2193 = vmatpush.bf16.msra.mxu0 %v1831
        %2194 = vmatpush.bf16.msra.mxu0 %v1830
        %2195 = vmatpush.bf16.msra.mxu0 %v1829
        %2196 = vmatpush.bf16.msra.mxu0 %v1828
        %2197 = vmatmul.bf16.gmra.mxu0 %v1071
        %v2198 = vpop.f32.mrf.mxu0
        %v2199 = vadd.f32 %v2156, %v2198
        %v2200 = vpop.f32.mrf.mxu0
        %v2201 = vadd.f32 %v2158, %v2200
        %2202 = vmatmul.bf16.gmra.mxu0 %v1087
        %v2203 = vpop.f32.mrf.mxu0
        %v2204 = vadd.f32 %v2161, %v2203
        %v2205 = vpop.f32.mrf.mxu0
        %v2206 = vadd.f32 %v2163, %v2205
        %2207 = vmatmul.bf16.gmra.mxu0 %v1103
        %v2208 = vpop.f32.mrf.mxu0
        %v2209 = vadd.f32 %v2166, %v2208
        %v2210 = vpop.f32.mrf.mxu0
        %v2211 = vadd.f32 %v2168, %v2210
        %2212 = vmatmul.bf16.gmra.mxu0 %v1119
        %v2213 = vpop.f32.mrf.mxu0
        %v2214 = vadd.f32 %v2171, %v2213
        %v2215 = vpop.f32.mrf.mxu0
        %v2216 = vadd.f32 %v2173, %v2215
        %2217 = vmatmul.bf16.gmra.mxu0 %v1135
        %v2218 = vpop.f32.mrf.mxu0
        %v2219 = vadd.f32 %v2176, %v2218
        %v2220 = vpop.f32.mrf.mxu0
        %v2221 = vadd.f32 %v2178, %v2220
        %2222 = vmatmul.bf16.gmra.mxu0 %v1151
        %v2223 = vpop.f32.mrf.mxu0
        %v2224 = vadd.f32 %v2181, %v2223
        %v2225 = vpop.f32.mrf.mxu0
        %v2226 = vadd.f32 %v2183, %v2225
        %2227 = vmatmul.bf16.gmra.mxu0 %v1167
        %v2228 = vpop.f32.mrf.mxu0
        %v2229 = vadd.f32 %v2186, %v2228
        %v2230 = vpop.f32.mrf.mxu0
        %2231 = vdwg.mxu0
        %2232 = vmatpush.bf16.msra.mxu0 %v1843
        %2233 = vmatpush.bf16.msra.mxu0 %v1842
        %2234 = vmatpush.bf16.msra.mxu0 %v1841
        %2235 = vmatpush.bf16.msra.mxu0 %v1840
        %2236 = vmatpush.bf16.msra.mxu0 %v1839
        %2237 = vmatpush.bf16.msra.mxu0 %v1838
        %2238 = vmatpush.bf16.msra.mxu0 %v1837
        %2239 = vmatpush.bf16.msra.mxu0 %v1836
        %2240 = vmatmul.bf16.gmra.mxu0 %v1072
        %v2241 = vpop.f32.mrf.mxu0
        %v2242 = vadd.f32 %v2199, %v2241
        %v2243 = vpop.f32.mrf.mxu0
        %v2244 = vadd.f32 %v2201, %v2243
        %2245 = vmatmul.bf16.gmra.mxu0 %v1088
        %v2246 = vpop.f32.mrf.mxu0
        %v2247 = vadd.f32 %v2204, %v2246
        %v2248 = vpop.f32.mrf.mxu0
        %v2249 = vadd.f32 %v2206, %v2248
        %2250 = vmatmul.bf16.gmra.mxu0 %v1104
        %v2251 = vpop.f32.mrf.mxu0
        %v2252 = vadd.f32 %v2209, %v2251
        %v2253 = vpop.f32.mrf.mxu0
        %v2254 = vadd.f32 %v2211, %v2253
        %2255 = vmatmul.bf16.gmra.mxu0 %v1120
        %v2256 = vpop.f32.mrf.mxu0
        %v2257 = vadd.f32 %v2214, %v2256
        %v2258 = vpop.f32.mrf.mxu0
        %v2259 = vadd.f32 %v2216, %v2258
        %2260 = vmatmul.bf16.gmra.mxu0 %v1136
        %v2261 = vpop.f32.mrf.mxu0
        %v2262 = vadd.f32 %v2219, %v2261
        %v2263 = vpop.f32.mrf.mxu0
        %v2264 = vadd.f32 %v2221, %v2263
        %2265 = vmatmul.bf16.gmra.mxu0 %v1152
        %v2266 = vpop.f32.mrf.mxu0
        %v2267 = vadd.f32 %v2224, %v2266
        %v2268 = vpop.f32.mrf.mxu0
        %v2269 = vadd.f32 %v2226, %v2268
        %2270 = vmatmul.bf16.gmra.mxu0 %v1168
        %v2271 = vpop.f32.mrf.mxu0
        %v2272 = vadd.f32 %v2229, %v2271
        %v2273 = vpop.f32.mrf.mxu0
        %2274 = vdwg.mxu0
        %2275 = vmatpush.bf16.msra.mxu0 %v1851
        %2276 = vmatpush.bf16.msra.mxu0 %v1850
        %2277 = vmatpush.bf16.msra.mxu0 %v1849
        %2278 = vmatpush.bf16.msra.mxu0 %v1848
        %2279 = vmatpush.bf16.msra.mxu0 %v1847
        %2280 = vmatpush.bf16.msra.mxu0 %v1846
        %2281 = vmatpush.bf16.msra.mxu0 %v1845
        %2282 = vmatpush.bf16.msra.mxu0 %v1844
        %2283 = vmatmul.bf16.gmra.mxu0 %v1073
        %v2284 = vpop.f32.mrf.mxu0
        %v2285 = vadd.f32 %v2242, %v2284
        %v2286 = vpop.f32.mrf.mxu0
        %v2287 = vadd.f32 %v2244, %v2286
        %2288 = vmatmul.bf16.gmra.mxu0 %v1089
        %v2289 = vpop.f32.mrf.mxu0
        %v2290 = vadd.f32 %v2247, %v2289
        %v2291 = vpop.f32.mrf.mxu0
        %v2292 = vadd.f32 %v2249, %v2291
        %2293 = vmatmul.bf16.gmra.mxu0 %v1105
        %v2294 = vpop.f32.mrf.mxu0
        %v2295 = vadd.f32 %v2252, %v2294
        %v2296 = vpop.f32.mrf.mxu0
        %v2297 = vadd.f32 %v2254, %v2296
        %2298 = vmatmul.bf16.gmra.mxu0 %v1121
        %v2299 = vpop.f32.mrf.mxu0
        %v2300 = vadd.f32 %v2257, %v2299
        %v2301 = vpop.f32.mrf.mxu0
        %v2302 = vadd.f32 %v2259, %v2301
        %2303 = vmatmul.bf16.gmra.mxu0 %v1137
        %v2304 = vpop.f32.mrf.mxu0
        %v2305 = vadd.f32 %v2262, %v2304
        %v2306 = vpop.f32.mrf.mxu0
        %v2307 = vadd.f32 %v2264, %v2306
        %2308 = vmatmul.bf16.gmra.mxu0 %v1153
        %v2309 = vpop.f32.mrf.mxu0
        %v2310 = vadd.f32 %v2267, %v2309
        %v2311 = vpop.f32.mrf.mxu0
        %v2312 = vadd.f32 %v2269, %v2311
        %2313 = vmatmul.bf16.gmra.mxu0 %v1169
        %v2314 = vpop.f32.mrf.mxu0
        %v2315 = vadd.f32 %v2272, %v2314
        %v2316 = vpop.f32.mrf.mxu0
        %2317 = vdwg.mxu0
        %2318 = vmatpush.bf16.msra.mxu0 %v1859
        %2319 = vmatpush.bf16.msra.mxu0 %v1858
        %2320 = vmatpush.bf16.msra.mxu0 %v1857
        %2321 = vmatpush.bf16.msra.mxu0 %v1856
        %2322 = vmatpush.bf16.msra.mxu0 %v1855
        %2323 = vmatpush.bf16.msra.mxu0 %v1854
        %2324 = vmatpush.bf16.msra.mxu0 %v1853
        %2325 = vmatpush.bf16.msra.mxu0 %v1852
        %2326 = vmatmul.bf16.gmra.mxu0 %v1074
        %v2327 = vpop.f32.mrf.mxu0
        %v2328 = vadd.f32 %v2285, %v2327
        %v2329 = vpop.f32.mrf.mxu0
        %v2330 = vadd.f32 %v2287, %v2329
        %2331 = vmatmul.bf16.gmra.mxu0 %v1090
        %v2332 = vpop.f32.mrf.mxu0
        %v2333 = vadd.f32 %v2290, %v2332
        %v2334 = vpop.f32.mrf.mxu0
        %v2335 = vadd.f32 %v2292, %v2334
        %2336 = vmatmul.bf16.gmra.mxu0 %v1106
        %v2337 = vpop.f32.mrf.mxu0
        %v2338 = vadd.f32 %v2295, %v2337
        %v2339 = vpop.f32.mrf.mxu0
        %v2340 = vadd.f32 %v2297, %v2339
        %2341 = vmatmul.bf16.gmra.mxu0 %v1122
        %v2342 = vpop.f32.mrf.mxu0
        %v2343 = vadd.f32 %v2300, %v2342
        %v2344 = vpop.f32.mrf.mxu0
        %v2345 = vadd.f32 %v2302, %v2344
        %2346 = vmatmul.bf16.gmra.mxu0 %v1138
        %v2347 = vpop.f32.mrf.mxu0
        %v2348 = vadd.f32 %v2305, %v2347
        %v2349 = vpop.f32.mrf.mxu0
        %v2350 = vadd.f32 %v2307, %v2349
        %2351 = vmatmul.bf16.gmra.mxu0 %v1154
        %v2352 = vpop.f32.mrf.mxu0
        %v2353 = vadd.f32 %v2310, %v2352
        %v2354 = vpop.f32.mrf.mxu0
        %v2355 = vadd.f32 %v2312, %v2354
        %2356 = vmatmul.bf16.gmra.mxu0 %v1170
        %v2357 = vpop.f32.mrf.mxu0
        %v2358 = vadd.f32 %v2315, %v2357
        %v2359 = vpop.f32.mrf.mxu0
        %2360 = vdwg.mxu0
        %2361 = vmatpush.bf16.msra.mxu0 %v1867
        %2362 = vmatpush.bf16.msra.mxu0 %v1866
        %2363 = vmatpush.bf16.msra.mxu0 %v1865
        %2364 = vmatpush.bf16.msra.mxu0 %v1864
        %2365 = vmatpush.bf16.msra.mxu0 %v1863
        %2366 = vmatpush.bf16.msra.mxu0 %v1862
        %2367 = vmatpush.bf16.msra.mxu0 %v1861
        %2368 = vmatpush.bf16.msra.mxu0 %v1860
        %2369 = vmatmul.bf16.gmra.mxu0 %v1075
        %v2370 = vpop.f32.mrf.mxu0
        %v2371 = vadd.f32 %v2328, %v2370
        %v2372 = vpop.f32.mrf.mxu0
        %v2373 = vadd.f32 %v2330, %v2372
        %2374 = vmatmul.bf16.gmra.mxu0 %v1091
        %v2375 = vpop.f32.mrf.mxu0
        %v2376 = vadd.f32 %v2333, %v2375
        %v2377 = vpop.f32.mrf.mxu0
        %v2378 = vadd.f32 %v2335, %v2377
        %2379 = vmatmul.bf16.gmra.mxu0 %v1107
        %v2380 = vpop.f32.mrf.mxu0
        %v2381 = vadd.f32 %v2338, %v2380
        %v2382 = vpop.f32.mrf.mxu0
        %v2383 = vadd.f32 %v2340, %v2382
        %2384 = vmatmul.bf16.gmra.mxu0 %v1123
        %v2385 = vpop.f32.mrf.mxu0
        %v2386 = vadd.f32 %v2343, %v2385
        %v2387 = vpop.f32.mrf.mxu0
        %v2388 = vadd.f32 %v2345, %v2387
        %2389 = vmatmul.bf16.gmra.mxu0 %v1139
        %v2390 = vpop.f32.mrf.mxu0
        %v2391 = vadd.f32 %v2348, %v2390
        %v2392 = vpop.f32.mrf.mxu0
        %v2393 = vadd.f32 %v2350, %v2392
        %2394 = vmatmul.bf16.gmra.mxu0 %v1155
        %v2395 = vpop.f32.mrf.mxu0
        %v2396 = vadd.f32 %v2353, %v2395
        %v2397 = vpop.f32.mrf.mxu0
        %v2398 = vadd.f32 %v2355, %v2397
        %2399 = vmatmul.bf16.gmra.mxu0 %v1171
        %v2400 = vpop.f32.mrf.mxu0
        %v2401 = vadd.f32 %v2358, %v2400
        %v2402 = vpop.f32.mrf.mxu0
        %2403 = vdwg.mxu0
        %2404 = vmatpush.bf16.msra.mxu0 %v1875
        %2405 = vmatpush.bf16.msra.mxu0 %v1874
        %2406 = vmatpush.bf16.msra.mxu0 %v1873
        %2407 = vmatpush.bf16.msra.mxu0 %v1872
        %2408 = vmatpush.bf16.msra.mxu0 %v1871
        %2409 = vmatpush.bf16.msra.mxu0 %v1870
        %2410 = vmatpush.bf16.msra.mxu0 %v1869
        %2411 = vmatpush.bf16.msra.mxu0 %v1868
        %2412 = vmatmul.bf16.gmra.mxu0 %v1076
        %v2413 = vpop.f32.mrf.mxu0
        %v2414 = vadd.f32 %v2371, %v2413
        %v2415 = vpop.f32.mrf.mxu0
        %v2416 = vadd.f32 %v2373, %v2415
        %2417 = vmatmul.bf16.gmra.mxu0 %v1092
        %v2418 = vpop.f32.mrf.mxu0
        %v2419 = vadd.f32 %v2376, %v2418
        %v2420 = vpop.f32.mrf.mxu0
        %v2421 = vadd.f32 %v2378, %v2420
        %2422 = vmatmul.bf16.gmra.mxu0 %v1108
        %v2423 = vpop.f32.mrf.mxu0
        %v2424 = vadd.f32 %v2381, %v2423
        %v2425 = vpop.f32.mrf.mxu0
        %v2426 = vadd.f32 %v2383, %v2425
        %2427 = vmatmul.bf16.gmra.mxu0 %v1124
        %v2428 = vpop.f32.mrf.mxu0
        %v2429 = vadd.f32 %v2386, %v2428
        %v2430 = vpop.f32.mrf.mxu0
        %v2431 = vadd.f32 %v2388, %v2430
        %2432 = vmatmul.bf16.gmra.mxu0 %v1140
        %v2433 = vpop.f32.mrf.mxu0
        %v2434 = vadd.f32 %v2391, %v2433
        %v2435 = vpop.f32.mrf.mxu0
        %v2436 = vadd.f32 %v2393, %v2435
        %2437 = vmatmul.bf16.gmra.mxu0 %v1156
        %v2438 = vpop.f32.mrf.mxu0
        %v2439 = vadd.f32 %v2396, %v2438
        %v2440 = vpop.f32.mrf.mxu0
        %v2441 = vadd.f32 %v2398, %v2440
        %2442 = vmatmul.bf16.gmra.mxu0 %v1172
        %v2443 = vpop.f32.mrf.mxu0
        %v2444 = vadd.f32 %v2401, %v2443
        %v2445 = vpop.f32.mrf.mxu0
        %2446 = vdwg.mxu0
        %2447 = vmatpush.bf16.msra.mxu0 %v1883
        %2448 = vmatpush.bf16.msra.mxu0 %v1882
        %2449 = vmatpush.bf16.msra.mxu0 %v1881
        %2450 = vmatpush.bf16.msra.mxu0 %v1880
        %2451 = vmatpush.bf16.msra.mxu0 %v1879
        %2452 = vmatpush.bf16.msra.mxu0 %v1878
        %2453 = vmatpush.bf16.msra.mxu0 %v1877
        %2454 = vmatpush.bf16.msra.mxu0 %v1876
        %2455 = vmatmul.bf16.gmra.mxu0 %v1077
        %v2456 = vpop.f32.mrf.mxu0
        %v2457 = vadd.f32 %v2414, %v2456
        %v2458 = vpop.f32.mrf.mxu0
        %v2459 = vadd.f32 %v2416, %v2458
        %2460 = vmatmul.bf16.gmra.mxu0 %v1093
        %v2461 = vpop.f32.mrf.mxu0
        %v2462 = vadd.f32 %v2419, %v2461
        %v2463 = vpop.f32.mrf.mxu0
        %v2464 = vadd.f32 %v2421, %v2463
        %2465 = vmatmul.bf16.gmra.mxu0 %v1109
        %v2466 = vpop.f32.mrf.mxu0
        %v2467 = vadd.f32 %v2424, %v2466
        %v2468 = vpop.f32.mrf.mxu0
        %v2469 = vadd.f32 %v2426, %v2468
        %2470 = vmatmul.bf16.gmra.mxu0 %v1125
        %v2471 = vpop.f32.mrf.mxu0
        %v2472 = vadd.f32 %v2429, %v2471
        %v2473 = vpop.f32.mrf.mxu0
        %v2474 = vadd.f32 %v2431, %v2473
        %2475 = vmatmul.bf16.gmra.mxu0 %v1141
        %v2476 = vpop.f32.mrf.mxu0
        %v2477 = vadd.f32 %v2434, %v2476
        %v2478 = vpop.f32.mrf.mxu0
        %v2479 = vadd.f32 %v2436, %v2478
        %2480 = vmatmul.bf16.gmra.mxu0 %v1157
        %v2481 = vpop.f32.mrf.mxu0
        %v2482 = vadd.f32 %v2439, %v2481
        %v2483 = vpop.f32.mrf.mxu0
        %v2484 = vadd.f32 %v2441, %v2483
        %2485 = vmatmul.bf16.gmra.mxu0 %v1173
        %v2486 = vpop.f32.mrf.mxu0
        %v2487 = vadd.f32 %v2444, %v2486
        %v2488 = vpop.f32.mrf.mxu0
        %2489 = vdwg.mxu0
        %2490 = vmatpush.bf16.msra.mxu0 %v1891
        %2491 = vmatpush.bf16.msra.mxu0 %v1890
        %2492 = vmatpush.bf16.msra.mxu0 %v1889
        %2493 = vmatpush.bf16.msra.mxu0 %v1888
        %2494 = vmatpush.bf16.msra.mxu0 %v1887
        %2495 = vmatpush.bf16.msra.mxu0 %v1886
        %2496 = vmatpush.bf16.msra.mxu0 %v1885
        %2497 = vmatpush.bf16.msra.mxu0 %v1884
        %2498 = vmatmul.bf16.gmra.mxu0 %v1078
        %v2499 = vpop.f32.mrf.mxu0
        %v2500 = vadd.f32 %v2457, %v2499
        %v2501 = vpop.f32.mrf.mxu0
        %v2502 = vadd.f32 %v2459, %v2501
        %2503 = vmatmul.bf16.gmra.mxu0 %v1094
        %v2504 = vpop.f32.mrf.mxu0
        %v2505 = vadd.f32 %v2462, %v2504
        %v2506 = vpop.f32.mrf.mxu0
        %v2507 = vadd.f32 %v2464, %v2506
        %2508 = vmatmul.bf16.gmra.mxu0 %v1110
        %v2509 = vpop.f32.mrf.mxu0
        %v2510 = vadd.f32 %v2467, %v2509
        %v2511 = vpop.f32.mrf.mxu0
        %v2512 = vadd.f32 %v2469, %v2511
        %2513 = vmatmul.bf16.gmra.mxu0 %v1126
        %v2514 = vpop.f32.mrf.mxu0
        %v2515 = vadd.f32 %v2472, %v2514
        %v2516 = vpop.f32.mrf.mxu0
        %v2517 = vadd.f32 %v2474, %v2516
        %2518 = vmatmul.bf16.gmra.mxu0 %v1142
        %v2519 = vpop.f32.mrf.mxu0
        %v2520 = vadd.f32 %v2477, %v2519
        %v2521 = vpop.f32.mrf.mxu0
        %v2522 = vadd.f32 %v2479, %v2521
        %2523 = vmatmul.bf16.gmra.mxu0 %v1158
        %v2524 = vpop.f32.mrf.mxu0
        %v2525 = vadd.f32 %v2482, %v2524
        %v2526 = vpop.f32.mrf.mxu0
        %v2527 = vadd.f32 %v2484, %v2526
        %2528 = vmatmul.bf16.gmra.mxu0 %v1174
        %v2529 = vpop.f32.mrf.mxu0
        %v2530 = vadd.f32 %v2487, %v2529
        %v2531 = vpop.f32.mrf.mxu0
        %2532 = vdwg.mxu0
        %2533 = vmatpush.bf16.msra.mxu0 %v1899
        %2534 = vmatpush.bf16.msra.mxu0 %v1898
        %2535 = vmatpush.bf16.msra.mxu0 %v1897
        %2536 = vmatpush.bf16.msra.mxu0 %v1896
        %2537 = vmatpush.bf16.msra.mxu0 %v1895
        %2538 = vmatpush.bf16.msra.mxu0 %v1894
        %2539 = vmatpush.bf16.msra.mxu0 %v1893
        %2540 = vmatpush.bf16.msra.mxu0 %v1892
        %2541 = vmatmul.bf16.gmra.mxu0 %v1079
        %v2542 = vpop.f32.mrf.mxu0
        %v2543 = vadd.f32 %v2500, %v2542
        %v2544 = vpop.f32.mrf.mxu0
        %v2545 = vadd.f32 %v2502, %v2544
        %2546 = vmatmul.bf16.gmra.mxu0 %v1095
        %v2547 = vpop.f32.mrf.mxu0
        %v2548 = vadd.f32 %v2505, %v2547
        %v2549 = vpop.f32.mrf.mxu0
        %v2550 = vadd.f32 %v2507, %v2549
        %2551 = vmatmul.bf16.gmra.mxu0 %v1111
        %v2552 = vpop.f32.mrf.mxu0
        %v2553 = vadd.f32 %v2510, %v2552
        %v2554 = vpop.f32.mrf.mxu0
        %v2555 = vadd.f32 %v2512, %v2554
        %2556 = vmatmul.bf16.gmra.mxu0 %v1127
        %v2557 = vpop.f32.mrf.mxu0
        %v2558 = vadd.f32 %v2515, %v2557
        %v2559 = vpop.f32.mrf.mxu0
        %v2560 = vadd.f32 %v2517, %v2559
        %2561 = vmatmul.bf16.gmra.mxu0 %v1143
        %v2562 = vpop.f32.mrf.mxu0
        %v2563 = vadd.f32 %v2520, %v2562
        %v2564 = vpop.f32.mrf.mxu0
        %v2565 = vadd.f32 %v2522, %v2564
        %2566 = vmatmul.bf16.gmra.mxu0 %v1159
        %v2567 = vpop.f32.mrf.mxu0
        %v2568 = vadd.f32 %v2525, %v2567
        %v2569 = vpop.f32.mrf.mxu0
        %v2570 = vadd.f32 %v2527, %v2569
        %2571 = vmatmul.bf16.gmra.mxu0 %v1175
        %v2572 = vpop.f32.mrf.mxu0
        %v2573 = vadd.f32 %v2530, %v2572
        %v2574 = vpop.f32.mrf.mxu0
        %2575 = vdwg.mxu0
        %2576 = vmatpush.bf16.msra.mxu0 %v1907
        %2577 = vmatpush.bf16.msra.mxu0 %v1906
        %2578 = vmatpush.bf16.msra.mxu0 %v1905
        %2579 = vmatpush.bf16.msra.mxu0 %v1904
        %2580 = vmatpush.bf16.msra.mxu0 %v1903
        %2581 = vmatpush.bf16.msra.mxu0 %v1902
        %2582 = vmatpush.bf16.msra.mxu0 %v1901
        %2583 = vmatpush.bf16.msra.mxu0 %v1900
        %2584 = vmatmul.bf16.gmra.mxu0 %v1080
        %v2585 = vpop.f32.mrf.mxu0
        %v2586 = vadd.f32 %v2543, %v2585
        %v2587 = vpop.f32.mrf.mxu0
        %v2588 = vadd.f32 %v2545, %v2587
        %2589 = vmatmul.bf16.gmra.mxu0 %v1096
        %v2590 = vpop.f32.mrf.mxu0
        %v2591 = vadd.f32 %v2548, %v2590
        %v2592 = vpop.f32.mrf.mxu0
        %v2593 = vadd.f32 %v2550, %v2592
        %2594 = vmatmul.bf16.gmra.mxu0 %v1112
        %v2595 = vpop.f32.mrf.mxu0
        %v2596 = vadd.f32 %v2553, %v2595
        %v2597 = vpop.f32.mrf.mxu0
        %v2598 = vadd.f32 %v2555, %v2597
        %2599 = vmatmul.bf16.gmra.mxu0 %v1128
        %v2600 = vpop.f32.mrf.mxu0
        %v2601 = vadd.f32 %v2558, %v2600
        %v2602 = vpop.f32.mrf.mxu0
        %v2603 = vadd.f32 %v2560, %v2602
        %2604 = vmatmul.bf16.gmra.mxu0 %v1144
        %v2605 = vpop.f32.mrf.mxu0
        %v2606 = vadd.f32 %v2563, %v2605
        %v2607 = vpop.f32.mrf.mxu0
        %v2608 = vadd.f32 %v2565, %v2607
        %2609 = vmatmul.bf16.gmra.mxu0 %v1160
        %v2610 = vpop.f32.mrf.mxu0
        %v2611 = vadd.f32 %v2568, %v2610
        %v2612 = vpop.f32.mrf.mxu0
        %v2613 = vadd.f32 %v2570, %v2612
        %2614 = vmatmul.bf16.gmra.mxu0 %v1176
        %v2615 = vpop.f32.mrf.mxu0
        %v2616 = vadd.f32 %v2573, %v2615
        %v2617 = vpop.f32.mrf.mxu0
        %2618 = vdwg.mxu0
        %2619 = vmatpush.bf16.msra.mxu0 %v1915
        %2620 = vmatpush.bf16.msra.mxu0 %v1914
        %2621 = vmatpush.bf16.msra.mxu0 %v1913
        %2622 = vmatpush.bf16.msra.mxu0 %v1912
        %2623 = vmatpush.bf16.msra.mxu0 %v1911
        %2624 = vmatpush.bf16.msra.mxu0 %v1910
        %2625 = vmatpush.bf16.msra.mxu0 %v1909
        %2626 = vmatpush.bf16.msra.mxu0 %v1908
        %2627 = vmatmul.bf16.gmra.mxu0 %v1081
        %v2628 = vpop.f32.mrf.mxu0
        %v2629 = vadd.f32 %v2586, %v2628
        %v2630 = vpop.f32.mrf.mxu0
        %v2631 = vadd.f32 %v2588, %v2630
        %2632 = vmatmul.bf16.gmra.mxu0 %v1097
        %v2633 = vpop.f32.mrf.mxu0
        %v2634 = vadd.f32 %v2591, %v2633
        %v2635 = vpop.f32.mrf.mxu0
        %v2636 = vadd.f32 %v2593, %v2635
        %2637 = vmatmul.bf16.gmra.mxu0 %v1113
        %v2638 = vpop.f32.mrf.mxu0
        %v2639 = vadd.f32 %v2596, %v2638
        %v2640 = vpop.f32.mrf.mxu0
        %v2641 = vadd.f32 %v2598, %v2640
        %2642 = vmatmul.bf16.gmra.mxu0 %v1129
        %v2643 = vpop.f32.mrf.mxu0
        %v2644 = vadd.f32 %v2601, %v2643
        %v2645 = vpop.f32.mrf.mxu0
        %v2646 = vadd.f32 %v2603, %v2645
        %2647 = vmatmul.bf16.gmra.mxu0 %v1145
        %v2648 = vpop.f32.mrf.mxu0
        %v2649 = vadd.f32 %v2606, %v2648
        %v2650 = vpop.f32.mrf.mxu0
        %v2651 = vadd.f32 %v2608, %v2650
        %2652 = vmatmul.bf16.gmra.mxu0 %v1161
        %v2653 = vpop.f32.mrf.mxu0
        %v2654 = vadd.f32 %v2611, %v2653
        %v2655 = vpop.f32.mrf.mxu0
        %v2656 = vadd.f32 %v2613, %v2655
        %2657 = vmatmul.bf16.gmra.mxu0 %v1177
        %v2658 = vpop.f32.mrf.mxu0
        %v2659 = vadd.f32 %v2616, %v2658
        %v2660 = vpop.f32.mrf.mxu0
        %2661 = vdwg.mxu0
        %2662 = vmatpush.bf16.msra.mxu0 %v1923
        %2663 = vmatpush.bf16.msra.mxu0 %v1922
        %2664 = vmatpush.bf16.msra.mxu0 %v1921
        %2665 = vmatpush.bf16.msra.mxu0 %v1920
        %2666 = vmatpush.bf16.msra.mxu0 %v1919
        %2667 = vmatpush.bf16.msra.mxu0 %v1918
        %2668 = vmatpush.bf16.msra.mxu0 %v1917
        %2669 = vmatpush.bf16.msra.mxu0 %v1916
        %2670 = vmatmul.bf16.gmra.mxu0 %v1082
        %v2671 = vpop.f32.mrf.mxu0
        %v2672 = vadd.f32 %v2629, %v2671
        %v2673 = vpop.f32.mrf.mxu0
        %v2674 = vadd.f32 %v2631, %v2673
        %2675 = vmatmul.bf16.gmra.mxu0 %v1098
        %v2676 = vpop.f32.mrf.mxu0
        %v2677 = vadd.f32 %v2634, %v2676
        %v2678 = vpop.f32.mrf.mxu0
        %v2679 = vadd.f32 %v2636, %v2678
        %2680 = vmatmul.bf16.gmra.mxu0 %v1114
        %v2681 = vpop.f32.mrf.mxu0
        %v2682 = vadd.f32 %v2639, %v2681
        %v2683 = vpop.f32.mrf.mxu0
        %v2684 = vadd.f32 %v2641, %v2683
        %2685 = vmatmul.bf16.gmra.mxu0 %v1130
        %v2686 = vpop.f32.mrf.mxu0
        %v2687 = vadd.f32 %v2644, %v2686
        %v2688 = vpop.f32.mrf.mxu0
        %v2689 = vadd.f32 %v2646, %v2688
        %2690 = vmatmul.bf16.gmra.mxu0 %v1146
        %v2691 = vpop.f32.mrf.mxu0
        %v2692 = vadd.f32 %v2649, %v2691
        %v2693 = vpop.f32.mrf.mxu0
        %v2694 = vadd.f32 %v2651, %v2693
        %2695 = vmatmul.bf16.gmra.mxu0 %v1162
        %v2696 = vpop.f32.mrf.mxu0
        %v2697 = vadd.f32 %v2654, %v2696
        %v2698 = vpop.f32.mrf.mxu0
        %v2699 = vadd.f32 %v2656, %v2698
        %2700 = vmatmul.bf16.gmra.mxu0 %v1178
        %v2701 = vpop.f32.mrf.mxu0
        %v2702 = vadd.f32 %v2659, %v2701
        %v2703 = vpop.f32.mrf.mxu0
        %2704 = vdwg.mxu0
        %2705 = vmatpush.bf16.msra.mxu0 %v1931
        %2706 = vmatpush.bf16.msra.mxu0 %v1930
        %2707 = vmatpush.bf16.msra.mxu0 %v1929
        %2708 = vmatpush.bf16.msra.mxu0 %v1928
        %2709 = vmatpush.bf16.msra.mxu0 %v1927
        %2710 = vmatpush.bf16.msra.mxu0 %v1926
        %2711 = vmatpush.bf16.msra.mxu0 %v1925
        %2712 = vmatpush.bf16.msra.mxu0 %v1924
        %2713 = vmatmul.bf16.gmra.mxu0 %v1083
        %v2714 = vpop.f32.mrf.mxu0
        %v2715 = vadd.f32 %v2672, %v2714
        %v2716 = vpop.f32.mrf.mxu0
        %v2717 = vadd.f32 %v2674, %v2716
        %2718 = vmatmul.bf16.gmra.mxu0 %v1099
        %v2719 = vpop.f32.mrf.mxu0
        %v2720 = vadd.f32 %v2677, %v2719
        %v2721 = vpop.f32.mrf.mxu0
        %v2722 = vadd.f32 %v2679, %v2721
        %2723 = vmatmul.bf16.gmra.mxu0 %v1115
        %v2724 = vpop.f32.mrf.mxu0
        %v2725 = vadd.f32 %v2682, %v2724
        %v2726 = vpop.f32.mrf.mxu0
        %v2727 = vadd.f32 %v2684, %v2726
        %2728 = vmatmul.bf16.gmra.mxu0 %v1131
        %v2729 = vpop.f32.mrf.mxu0
        %v2730 = vadd.f32 %v2687, %v2729
        %v2731 = vpop.f32.mrf.mxu0
        %v2732 = vadd.f32 %v2689, %v2731
        %2733 = vmatmul.bf16.gmra.mxu0 %v1147
        %v2734 = vpop.f32.mrf.mxu0
        %v2735 = vadd.f32 %v2692, %v2734
        %v2736 = vpop.f32.mrf.mxu0
        %v2737 = vadd.f32 %v2694, %v2736
        %2738 = vmatmul.bf16.gmra.mxu0 %v1163
        %v2739 = vpop.f32.mrf.mxu0
        %v2740 = vadd.f32 %v2697, %v2739
        %v2741 = vpop.f32.mrf.mxu0
        %v2742 = vadd.f32 %v2699, %v2741
        %2743 = vmatmul.bf16.gmra.mxu0 %v1179
        %v2744 = vpop.f32.mrf.mxu0
        %v2745 = vadd.f32 %v2702, %v2744
        %v2746 = vpop.f32.mrf.mxu0
        %2747 = vdwg.mxu0
        %v2748 = vadd.f32 %v383, %v2715
        %v2749 = vadd.f32 %v384, %v2717
        %v2750 = vadd.f32 %v385, %v2720
        %v2751 = vadd.f32 %v386, %v2722
        %v2752 = vadd.f32 %v387, %v2725
        %v2753 = vadd.f32 %v388, %v2727
        %v2754 = vadd.f32 %v389, %v2730
        %v2755 = vadd.f32 %v390, %v2732
        %v2756 = vadd.f32 %v391, %v2735
        %v2757 = vadd.f32 %v392, %v2737
        %v2758 = vadd.f32 %v393, %v2740
        %v2759 = vadd.f32 %v394, %v2742
        %v2760 = vadd.f32 %v395, %v2745
        %2761 = vst [vmem:[#allocation2] sm:$0xff] %v2748
        %2762 = vst [vmem:[#allocation2 + $0x8] sm:$0xff] %v2749
        %2763 = vst [vmem:[#allocation2 + $0x10] sm:$0xff] %v2750
        %2764 = vst [vmem:[#allocation2 + $0x18] sm:$0xff] %v2751
        %2765 = vst [vmem:[#allocation2 + $0x20] sm:$0xff] %v2752
        %2766 = vst [vmem:[#allocation2 + $0x28] sm:$0xff] %v2753
        %2767 = vst [vmem:[#allocation2 + $0x30] sm:$0xff] %v2754
        %2768 = vst [vmem:[#allocation2 + $0x38] sm:$0xff] %v2755
        %2769 = vst [vmem:[#allocation2 + $0x40] sm:$0xff] %v2756
        %2770 = vst [vmem:[#allocation2 + $0x48] sm:$0xff] %v2757
        %2771 = vst [vmem:[#allocation2 + $0x50] sm:$0xff] %v2758
        %2772 = vst [vmem:[#allocation2 + $0x58] sm:$0xff] %v2759
        %2773 = vst [vmem:[#allocation2 + $0x60] sm:$0xff] %v2760
        %p2774 = scmp.eq.s32.totalorder %s32, 1
        // Predicated region
        $region57: #{tpu_custom_call.1} parent=35 // pred_check
          %p2775 = pneg %p2774
        $region58: #{tpu_custom_call.1} parent=35 // pred_check_branch
          %2777 = sbr.rel (%p2775) target = $region60
        $region59: #{tpu_custom_call.1} parent=35 // pred_region
          %v2778 = vld [vmem:[#allocation2] sm:$0xff]
          %v2779 = vld [vmem:[#allocation2 + $0x8] sm:$0xff]
          %v2780 = vld [vmem:[#allocation2 + $0x10] sm:$0xff]
          %v2781 = vld [vmem:[#allocation2 + $0x18] sm:$0xff]
          %v2782 = vld [vmem:[#allocation2 + $0x20] sm:$0xff]
          %v2783 = vld [vmem:[#allocation2 + $0x28] sm:$0xff]
          %v2784 = vld [vmem:[#allocation2 + $0x30] sm:$0xff]
          %v2785 = vld [vmem:[#allocation2 + $0x38] sm:$0xff]
          %v2786 = vld [vmem:[#allocation2 + $0x40] sm:$0xff]
          %v2787 = vld [vmem:[#allocation2 + $0x48] sm:$0xff]
          %v2788 = vld [vmem:[#allocation2 + $0x50] sm:$0xff]
          %v2789 = vld [vmem:[#allocation2 + $0x58] sm:$0xff]
          %v2790 = vld [vmem:[#allocation2 + $0x60] sm:$0xff]
          %v2791 = vld [vmem:[#allocation8] sm:$0x1]
          %v2793 = vperm.slane %v2791, 0
          %v2795 = vadd.f32 %v2778, %v2793
          %v2796 = vadd.f32 %v2779, %v2793
          %v2797 = vadd.f32 %v2780, %v2793
          %v2798 = vadd.f32 %v2781, %v2793
          %v2799 = vadd.f32 %v2782, %v2793
          %v2800 = vadd.f32 %v2783, %v2793
          %v2801 = vadd.f32 %v2784, %v2793
          %v2802 = vadd.f32 %v2785, %v2793
          %v2803 = vadd.f32 %v2786, %v2793
          %v2804 = vadd.f32 %v2787, %v2793
          %v2805 = vadd.f32 %v2788, %v2793
          %v2806 = vadd.f32 %v2789, %v2793
          %v2807 = vadd.f32 %v2790, %v2793
          %vm2808 = vcmp.gt.f32.partialorder %v2795, 0.0
          %vm2809 = vcmp.gt.f32.partialorder %v2796, 0.0
          %vm2810 = vcmp.gt.f32.partialorder %v2797, 0.0
          %vm2811 = vcmp.gt.f32.partialorder %v2798, 0.0
          %vm2812 = vcmp.gt.f32.partialorder %v2799, 0.0
          %vm2813 = vcmp.gt.f32.partialorder %v2800, 0.0
          %vm2814 = vcmp.gt.f32.partialorder %v2801, 0.0
          %vm2815 = vcmp.gt.f32.partialorder %v2802, 0.0
          %vm2816 = vcmp.gt.f32.partialorder %v2803, 0.0
          %vm2817 = vcmp.gt.f32.partialorder %v2804, 0.0
          %vm2818 = vcmp.gt.f32.partialorder %v2805, 0.0
          %vm2819 = vcmp.gt.f32.partialorder %v2806, 0.0
          %vm2820 = vcmp.gt.f32.partialorder %v2807, 0.0
          %v2821 = vmul.f32 %v2795, 0.2
          %v2822 = vmul.f32 %v2796, 0.2
          %v2823 = vmul.f32 %v2797, 0.2
          %v2824 = vmul.f32 %v2798, 0.2
          %v2825 = vmul.f32 %v2799, 0.2
          %v2826 = vmul.f32 %v2800, 0.2
          %v2827 = vmul.f32 %v2801, 0.2
          %v2828 = vmul.f32 %v2802, 0.2
          %v2829 = vmul.f32 %v2803, 0.2
          %v2830 = vmul.f32 %v2804, 0.2
          %v2831 = vmul.f32 %v2805, 0.2
          %v2832 = vmul.f32 %v2806, 0.2
          %v2833 = vmul.f32 %v2807, 0.2
          %v2834 = vsel %vm2808, %v2795, %v2821
          %v2835 = vsel %vm2809, %v2796, %v2822
          %v2836 = vsel %vm2810, %v2797, %v2823
          %v2837 = vsel %vm2811, %v2798, %v2824
          %v2838 = vsel %vm2812, %v2799, %v2825
          %v2839 = vsel %vm2813, %v2800, %v2826
          %v2840 = vsel %vm2814, %v2801, %v2827
          %v2841 = vsel %vm2815, %v2802, %v2828
          %v2842 = vsel %vm2816, %v2803, %v2829
          %v2843 = vsel %vm2817, %v2804, %v2830
          %v2844 = vsel %vm2818, %v2805, %v2831
          %v2845 = vsel %vm2819, %v2806, %v2832
          %v2846 = vsel %vm2820, %v2807, %v2833
          %v2847 = vld [vmem:[%s312] sm:$0xff]
          %v2848 = vld [vmem:[%s312 + $0x8] sm:$0xff]
          %v2849 = vld [vmem:[%s312 + $0x10] sm:$0xff]
          %v2850 = vld [vmem:[%s312 + $0x18] sm:$0xff]
          %v2851 = vld [vmem:[%s312 + $0x20] sm:$0xff]
          %v2852 = vld [vmem:[%s312 + $0x28] sm:$0xff]
          %v2853 = vld [vmem:[%s312 + $0x30] sm:$0xff]
          %v2854 = vld [vmem:[%s312 + $0x38] sm:$0xff]
          %v2855 = vld [vmem:[%s312 + $0x40] sm:$0xff]
          %v2856 = vld [vmem:[%s312 + $0x48] sm:$0xff]
          %v2857 = vld [vmem:[%s312 + $0x50] sm:$0xff]
          %v2858 = vld [vmem:[%s312 + $0x58] sm:$0xff]
          %v2859 = vld [vmem:[%s312 + $0x60] sm:$0xff]
          %v2860 = vadd.f32 %v2834, %v2847
          %v2861 = vadd.f32 %v2835, %v2848
          %v2862 = vadd.f32 %v2836, %v2849
          %v2863 = vadd.f32 %v2837, %v2850
          %v2864 = vadd.f32 %v2838, %v2851
          %v2865 = vadd.f32 %v2839, %v2852
          %v2866 = vadd.f32 %v2840, %v2853
          %v2867 = vadd.f32 %v2841, %v2854
          %v2868 = vadd.f32 %v2842, %v2855
          %v2869 = vadd.f32 %v2843, %v2856
          %v2870 = vadd.f32 %v2844, %v2857
          %v2871 = vadd.f32 %v2845, %v2858
          %v2872 = vadd.f32 %v2846, %v2859
          %2873 = vst [vmem:[%s347] sm:$0xff] %v2860
          %2874 = vst [vmem:[%s347 + $0x8] sm:$0xff] %v2861
          %2875 = vst [vmem:[%s347 + $0x10] sm:$0xff] %v2862
          %2876 = vst [vmem:[%s347 + $0x18] sm:$0xff] %v2863
          %2877 = vst [vmem:[%s347 + $0x20] sm:$0xff] %v2864
          %2878 = vst [vmem:[%s347 + $0x28] sm:$0xff] %v2865
          %2879 = vst [vmem:[%s347 + $0x30] sm:$0xff] %v2866
          %2880 = vst [vmem:[%s347 + $0x38] sm:$0xff] %v2867
          %2881 = vst [vmem:[%s347 + $0x40] sm:$0xff] %v2868
          %2882 = vst [vmem:[%s347 + $0x48] sm:$0xff] %v2869
          %2883 = vst [vmem:[%s347 + $0x50] sm:$0xff] %v2870
          %2884 = vst [vmem:[%s347 + $0x58] sm:$0xff] %v2871
          %2885 = vst [vmem:[%s347 + $0x60] sm:$0xff] %v2872
        $region60: #{tpu_custom_call.1} parent=35 // pred_fallthru
          _
        %s2886 = sand.u32 %s148, 1
        %s2887 = scalar_lea.sflag [#allocation5], %s2886
        %s2888 = sand.u32 %s148, 1
        %s2889 = smul.addr %s2888, 104
        %s2890 = scalar_lea.vmem [#allocation11], %s2889
        // Predicated region
        $region61: #{tpu_custom_call.1} parent=35 // pred_check
          %p2891 = pneg %p158
        $region62: #{tpu_custom_call.1} parent=35 // pred_check_branch
          %2893 = sbr.rel (%p2891) target = $region64
        $region63: #{tpu_custom_call.1} parent=35 // pred_region
          %s2894 = smul.u32 13, %s31
          %s2895 = ssub.s32 25, %s2894
          %p2896 = scmp.lt.s32.totalorder %s2895, 13
          %s2897 = scalar_select %p2896, %s2895, 13
          %s2898 = smul.u32 8, %s2897
          %s2899 = ssub.s32 104, %s2898
          %s2900 = sshll.u32 %s2899, 4
          %2901 = vsyncadd %s2887, %s2900
          %p2902 = scmp.ne.s32.totalorder 0, %s2898
          %s2903 = smul.addr %s2894, 8
          %s2904 = scalar_lea.hbm %s4, %s2903
          %s2905 = smul.u32 8, %s2897
          %s2906 = sshll.u32 %s2890, 4
          %s2907 = int_to_ptr.vmem [resolvable:$true] %s2906
          %s2908 = sshll.u32 %s2904, 4
          %s2909 = int_to_ptr.hbm [resolvable:$true] %s2908
          %s2910 = sshll.u32 %s2905, 4
          %2914 = dma.vmem_to_hbm [thread:$0]  (%p2902), %s2907, %s2910, %s2909, %s2887, 128, 128, 8
        $region64: #{tpu_custom_call.1} parent=35 // pred_fallthru
          _
      $region36: #{tpu_custom_call.1} parent=5 // pred_fallthru
        _
      %p2915 = scmp.le.s32.totalorder 2, %s22
      // Predicated region
      $region65: #{tpu_custom_call.1} parent=5 // pred_check
        %p2916 = pneg %p2915
      $region66: #{tpu_custom_call.1} parent=5 // pred_check_branch
        %2918 = sbr.rel (%p2916) target = $region68
      $region67: #{tpu_custom_call.1} parent=5 // pred_region
        %s2919 = ssub.s32 %s22, 2
        // Predicated region
        $region69: #{tpu_custom_call.1} parent=67 // pred_check
          %p2920 = pneg %p164
        $region70: #{tpu_custom_call.1} parent=67 // pred_check_branch
          %2922 = sbr.rel (%p2920) target = $region72
        $region71: #{tpu_custom_call.1} parent=67 // pred_region
          %s2923 = sand.u32 %s149, 1
          %s2924 = scalar_lea.sflag [#allocation5], %s2923
          %s2925 = sand.u32 %s149, 1
          %s2926 = smul.addr %s2925, 104
          %s2927 = scalar_lea.vmem [#allocation11], %s2926
          %2929 = dma.done %s2924, 1664
        $region72: #{tpu_custom_call.1} parent=67 // pred_fallthru
          _
      $region68: #{tpu_custom_call.1} parent=5 // pred_fallthru
        _
    $region6: #{tpu_custom_call.1} parent=1 // loop_footer
      %s26 = sadd.s32 1, %s22
    $region7: #{tpu_custom_call.1} parent=1 // loop_footer_branch
      %21 = sbr.rel target = $region3
    $region8: #{tpu_custom_call.1} parent=1 // loop_exit
      _
    %2930 = vsyncpa [#allocation4], 1
    %s2931 = scalar_lea.sflag [#allocation4], 1
    %2932 = vsyncpa %s2931, 1
    %2933 = vsyncpa [#allocation7], 1
    %s2934 = scalar_lea.sflag [#allocation7], 1
    %2935 = vsyncpa %s2934, 1
    %2936 = vsyncpa [#allocation10], 1
    %s2937 = scalar_lea.sflag [#allocation10], 1
    %2938 = vsyncpa %s2937, 1
    %2939 = vsyncpa [#allocation5], 1
    %s2940 = scalar_lea.sflag [#allocation5], 1
    %2941 = vsyncpa %s2940, 1

</llo_original>
